<compile_context>
chip_gen: v6e
topology: v6e:2x2x1
jax: 0.10.0
libtpu: 0.0.40
codegen_flags: <defaults>
</compile_context>

<pallas_src>
import jax
import jax.numpy as jnp
from jax.experimental import pallas as pl
from jax.experimental.pallas import tpu as pltpu


def _gather_kernel(ids_ref, w_hbm, out_ref, scratch, sem):
    # ids_ref : (N_pad,) int32 in SMEM (scalar-prefetched token ids)
    # w_hbm   : (V, D) embedding table, raw HBM ref (memory_space=pl.ANY)
    # out_ref : (RB, D) pipelined VMEM output block
    # scratch : (RB, D) VMEM gather buffer
    # sem     : single DMA semaphore shared by all equal-sized row copies
    rb = out_ref.shape[0]
    base = pl.program_id(0) * rb

    # Issue all row DMAs for this block before waiting on any of them so the
    # per-row HBM latency is overlapped across the batch of rows.
    copies = []
    for r in range(rb):                       # rb is static -> unrolled
        tok = ids_ref[base + r]
        cp = pltpu.make_async_copy(
            w_hbm.at[pl.ds(tok, 1)],          # (1, D) row in HBM
            scratch.at[pl.ds(r, 1)],          # (1, D) row in VMEM
            sem,
        )
        cp.start()
        copies.append(cp)
    for cp in copies:                         # drain: all rows have landed
        cp.wait()

    out_ref[...] = scratch[...]


def token_embedding_forward(input_ids, weight, *, row_block=128):
    """input_ids: (B, S) int -> (B, S, D), matching nn.Embedding's forward."""
    b, s = input_ids.shape
    v, d = weight.shape
    n = b * s

    # Sublane-aligned row block; pad N up instead of asserting divisibility.
    rb = min(row_block, n)
    rb = ((rb + 7) // 8) * 8
    n_pad = ((n + rb - 1) // rb) * rb

    ids = input_ids.reshape(n).astype(jnp.int32)
    # torch.nn.Embedding raises on out-of-range ids; a DMA gather would read
    # an arbitrary row, so clamp defensively. Padded tail rows use id 0 and
    # are sliced off below.
    ids = jnp.clip(ids, 0, v - 1)
    ids = jnp.pad(ids, (0, n_pad - n))

    out = pl.pallas_call(
        _gather_kernel,
        out_shape=jax.ShapeDtypeStruct((n_pad, d), weight.dtype),
        grid_spec=pltpu.PrefetchScalarGridSpec(
            num_scalar_prefetch=1,                         # ids -> SMEM
            grid=(n_pad // rb,),
            in_specs=[pl.BlockSpec(memory_space=pl.ANY)],  # table stays in HBM
            out_specs=pl.BlockSpec((rb, d), lambda i, ids: (i, 0)),
            scratch_shapes=[
                pltpu.VMEM((rb, d), weight.dtype),
                pltpu.SemaphoreType.DMA(()),
            ],
        ),
        compiler_params=pltpu.CompilerParams(
            dimension_semantics=("parallel",),   # shards blocks across v7x TCs
        ),
    )(ids, weight)

    return out[:n].reshape(b, s, d)


def make_token_embedding_params(key, vocab_size, embedding_dim, padding_idx=0):
    """Xavier-uniform init (as nn.init.xavier_uniform_), padding row zeroed."""
    bound = (6.0 / (vocab_size + embedding_dim)) ** 0.5
    w = jax.random.uniform(
        key, (vocab_size, embedding_dim),
        minval=-bound, maxval=bound, dtype=jnp.float32,
    )
    w = w.at[padding_idx].set(0.0)
    return w


if __name__ == "__main__":
    key = jax.random.PRNGKey(0)
    k_w, k_ids = jax.random.split(key)

    vocab_size = 64
    embedding_dim = 128          # lane-dense (multiple of 128) embedding dim
    batch, seq = 2, 60           # N = 120 -> exercises padding to row_block
    padding_idx = 0

    weight = make_token_embedding_params(k_w, vocab_size, embedding_dim, padding_idx)
    input_ids = jax.random.randint(k_ids, (batch, seq), 0, vocab_size, dtype=jnp.int32)
    # make sure some padding tokens are present
    input_ids = input_ids.at[0, 0].set(padding_idx)

    out = token_embedding_forward(input_ids, weight, row_block=32)
    out = jax.block_until_ready(out)

    # reference: plain gather
    ref = jnp.take(weight, input_ids, axis=0)
    assert out.shape == (batch, seq, embedding_dim)
    assert jnp.allclose(out, ref, atol=1e-6), "mismatch vs. reference gather"
    assert jnp.all(out[0, 0] == 0.0), "padding row must be zero"

    print("KERNEL_OK")
</pallas_src>

<mosaic_0001>
module attributes {stable_mosaic.version = 11 : i64} {
  func.func @_gather_kernel(%arg0: i32, %arg1: memref<128xi32, #tpu.memory_space<smem>>, %arg2: memref<64x128xf32, #tpu.memory_space<any>>, %arg3: memref<32x128xf32, #tpu.memory_space<vmem>>, %arg4: memref<32x128xf32, #tpu.memory_space<vmem>>, %arg5: memref<!tpu.dma_semaphore, #tpu.memory_space<semaphore_mem>>) attributes {dimension_semantics = [#tpu.dimension_semantics<parallel>], iteration_bounds = array<i64: 4>, scalar_prefetch = 1 : i64, scratch_operands = 2 : i64, tpu.core_type = #tpu.core_type<tc>, window_params = [{}, {transform_indices = @transform_1, window_bounds = array<i64: 32, 128>}]} {
    %c32_i32 = arith.constant 32 : i32
    %0 = arith.muli %arg0, %c32_i32 : i32
    %c0_i32 = arith.constant 0 : i32
    %1 = arith.addi %0, %c0_i32 : i32
    %2 = arith.index_cast %1 : i32 to index
    %3 = memref.load %arg1[%2] : memref<128xi32, #tpu.memory_space<smem>>
    %c0_i32_0 = arith.constant 0 : i32
    %4 = tpu.memref_slice %arg2[%3, %c0_i32_0] : memref<64x128xf32, #tpu.memory_space<any>> -> memref<1x128xf32, #tpu.memory_space<any>>
    %c0_i32_1 = arith.constant 0 : i32
    %c0_i32_2 = arith.constant 0 : i32
    %5 = tpu.memref_slice %arg4[%c0_i32_1, %c0_i32_2] : memref<32x128xf32, #tpu.memory_space<vmem>> -> memref<1x128xf32, #tpu.memory_space<vmem>>
    tpu.enqueue_dma source(%4 : memref<1x128xf32, #tpu.memory_space<any>>) target(%5 : memref<1x128xf32, #tpu.memory_space<vmem>>) target_semaphore(%arg5 : memref<!tpu.dma_semaphore, #tpu.memory_space<semaphore_mem>>)
    %c1_i32 = arith.constant 1 : i32
    %6 = arith.addi %0, %c1_i32 : i32
    %7 = arith.index_cast %6 : i32 to index
    %8 = memref.load %arg1[%7] : memref<128xi32, #tpu.memory_space<smem>>
    %c0_i32_3 = arith.constant 0 : i32
    %9 = tpu.memref_slice %arg2[%8, %c0_i32_3] : memref<64x128xf32, #tpu.memory_space<any>> -> memref<1x128xf32, #tpu.memory_space<any>>
    %c1_i32_4 = arith.constant 1 : i32
    %c0_i32_5 = arith.constant 0 : i32
    %10 = tpu.memref_slice %arg4[%c1_i32_4, %c0_i32_5] : memref<32x128xf32, #tpu.memory_space<vmem>> -> memref<1x128xf32, #tpu.memory_space<vmem>>
    tpu.enqueue_dma source(%9 : memref<1x128xf32, #tpu.memory_space<any>>) target(%10 : memref<1x128xf32, #tpu.memory_space<vmem>>) target_semaphore(%arg5 : memref<!tpu.dma_semaphore, #tpu.memory_space<semaphore_mem>>)
    %c2_i32 = arith.constant 2 : i32
    %11 = arith.addi %0, %c2_i32 : i32
    %12 = arith.index_cast %11 : i32 to index
    %13 = memref.load %arg1[%12] : memref<128xi32, #tpu.memory_space<smem>>
    %c0_i32_6 = arith.constant 0 : i32
    %14 = tpu.memref_slice %arg2[%13, %c0_i32_6] : memref<64x128xf32, #tpu.memory_space<any>> -> memref<1x128xf32, #tpu.memory_space<any>>
    %c2_i32_7 = arith.constant 2 : i32
    %c0_i32_8 = arith.constant 0 : i32
    %15 = tpu.memref_slice %arg4[%c2_i32_7, %c0_i32_8] : memref<32x128xf32, #tpu.memory_space<vmem>> -> memref<1x128xf32, #tpu.memory_space<vmem>>
    tpu.enqueue_dma source(%14 : memref<1x128xf32, #tpu.memory_space<any>>) target(%15 : memref<1x128xf32, #tpu.memory_space<vmem>>) target_semaphore(%arg5 : memref<!tpu.dma_semaphore, #tpu.memory_space<semaphore_mem>>)
    %c3_i32 = arith.constant 3 : i32
    %16 = arith.addi %0, %c3_i32 : i32
    %17 = arith.index_cast %16 : i32 to index
    %18 = memref.load %arg1[%17] : memref<128xi32, #tpu.memory_space<smem>>
    %c0_i32_9 = arith.constant 0 : i32
    %19 = tpu.memref_slice %arg2[%18, %c0_i32_9] : memref<64x128xf32, #tpu.memory_space<any>> -> memref<1x128xf32, #tpu.memory_space<any>>
    %c3_i32_10 = arith.constant 3 : i32
    %c0_i32_11 = arith.constant 0 : i32
    %20 = tpu.memref_slice %arg4[%c3_i32_10, %c0_i32_11] : memref<32x128xf32, #tpu.memory_space<vmem>> -> memref<1x128xf32, #tpu.memory_space<vmem>>
    tpu.enqueue_dma source(%19 : memref<1x128xf32, #tpu.memory_space<any>>) target(%20 : memref<1x128xf32, #tpu.memory_space<vmem>>) target_semaphore(%arg5 : memref<!tpu.dma_semaphore, #tpu.memory_space<semaphore_mem>>)
    %c4_i32 = arith.constant 4 : i32
    %21 = arith.addi %0, %c4_i32 : i32
    %22 = arith.index_cast %21 : i32 to index
    %23 = memref.load %arg1[%22] : memref<128xi32, #tpu.memory_space<smem>>
    %c0_i32_12 = arith.constant 0 : i32
    %24 = tpu.memref_slice %arg2[%23, %c0_i32_12] : memref<64x128xf32, #tpu.memory_space<any>> -> memref<1x128xf32, #tpu.memory_space<any>>
    %c4_i32_13 = arith.constant 4 : i32
    %c0_i32_14 = arith.constant 0 : i32
    %25 = tpu.memref_slice %arg4[%c4_i32_13, %c0_i32_14] : memref<32x128xf32, #tpu.memory_space<vmem>> -> memref<1x128xf32, #tpu.memory_space<vmem>>
    tpu.enqueue_dma source(%24 : memref<1x128xf32, #tpu.memory_space<any>>) target(%25 : memref<1x128xf32, #tpu.memory_space<vmem>>) target_semaphore(%arg5 : memref<!tpu.dma_semaphore, #tpu.memory_space<semaphore_mem>>)
    %c5_i32 = arith.constant 5 : i32
    %26 = arith.addi %0, %c5_i32 : i32
    %27 = arith.index_cast %26 : i32 to index
    %28 = memref.load %arg1[%27] : memref<128xi32, #tpu.memory_space<smem>>
    %c0_i32_15 = arith.constant 0 : i32
    %29 = tpu.memref_slice %arg2[%28, %c0_i32_15] : memref<64x128xf32, #tpu.memory_space<any>> -> memref<1x128xf32, #tpu.memory_space<any>>
    %c5_i32_16 = arith.constant 5 : i32
    %c0_i32_17 = arith.constant 0 : i32
    %30 = tpu.memref_slice %arg4[%c5_i32_16, %c0_i32_17] : memref<32x128xf32, #tpu.memory_space<vmem>> -> memref<1x128xf32, #tpu.memory_space<vmem>>
    tpu.enqueue_dma source(%29 : memref<1x128xf32, #tpu.memory_space<any>>) target(%30 : memref<1x128xf32, #tpu.memory_space<vmem>>) target_semaphore(%arg5 : memref<!tpu.dma_semaphore, #tpu.memory_space<semaphore_mem>>)
    %c6_i32 = arith.constant 6 : i32
    %31 = arith.addi %0, %c6_i32 : i32
    %32 = arith.index_cast %31 : i32 to index
    %33 = memref.load %arg1[%32] : memref<128xi32, #tpu.memory_space<smem>>
    %c0_i32_18 = arith.constant 0 : i32
    %34 = tpu.memref_slice %arg2[%33, %c0_i32_18] : memref<64x128xf32, #tpu.memory_space<any>> -> memref<1x128xf32, #tpu.memory_space<any>>
    %c6_i32_19 = arith.constant 6 : i32
    %c0_i32_20 = arith.constant 0 : i32
    %35 = tpu.memref_slice %arg4[%c6_i32_19, %c0_i32_20] : memref<32x128xf32, #tpu.memory_space<vmem>> -> memref<1x128xf32, #tpu.memory_space<vmem>>
    tpu.enqueue_dma source(%34 : memref<1x128xf32, #tpu.memory_space<any>>) target(%35 : memref<1x128xf32, #tpu.memory_space<vmem>>) target_semaphore(%arg5 : memref<!tpu.dma_semaphore, #tpu.memory_space<semaphore_mem>>)
    %c7_i32 = arith.constant 7 : i32
    %36 = arith.addi %0, %c7_i32 : i32
    %37 = arith.index_cast %36 : i32 to index
    %38 = memref.load %arg1[%37] : memref<128xi32, #tpu.memory_space<smem>>
    %c0_i32_21 = arith.constant 0 : i32
    %39 = tpu.memref_slice %arg2[%38, %c0_i32_21] : memref<64x128xf32, #tpu.memory_space<any>> -> memref<1x128xf32, #tpu.memory_space<any>>
    %c7_i32_22 = arith.constant 7 : i32
    %c0_i32_23 = arith.constant 0 : i32
    %40 = tpu.memref_slice %arg4[%c7_i32_22, %c0_i32_23] : memref<32x128xf32, #tpu.memory_space<vmem>> -> memref<1x128xf32, #tpu.memory_space<vmem>>
    tpu.enqueue_dma source(%39 : memref<1x128xf32, #tpu.memory_space<any>>) target(%40 : memref<1x128xf32, #tpu.memory_space<vmem>>) target_semaphore(%arg5 : memref<!tpu.dma_semaphore, #tpu.memory_space<semaphore_mem>>)
    %c8_i32 = arith.constant 8 : i32
    %41 = arith.addi %0, %c8_i32 : i32
    %42 = arith.index_cast %41 : i32 to index
    %43 = memref.load %arg1[%42] : memref<128xi32, #tpu.memory_space<smem>>
    %c0_i32_24 = arith.constant 0 : i32
    %44 = tpu.memref_slice %arg2[%43, %c0_i32_24] : memref<64x128xf32, #tpu.memory_space<any>> -> memref<1x128xf32, #tpu.memory_space<any>>
    %c8_i32_25 = arith.constant 8 : i32
    %c0_i32_26 = arith.constant 0 : i32
    %45 = tpu.memref_slice %arg4[%c8_i32_25, %c0_i32_26] : memref<32x128xf32, #tpu.memory_space<vmem>> -> memref<1x128xf32, #tpu.memory_space<vmem>>
    tpu.enqueue_dma source(%44 : memref<1x128xf32, #tpu.memory_space<any>>) target(%45 : memref<1x128xf32, #tpu.memory_space<vmem>>) target_semaphore(%arg5 : memref<!tpu.dma_semaphore, #tpu.memory_space<semaphore_mem>>)
    %c9_i32 = arith.constant 9 : i32
    %46 = arith.addi %0, %c9_i32 : i32
    %47 = arith.index_cast %46 : i32 to index
    %48 = memref.load %arg1[%47] : memref<128xi32, #tpu.memory_space<smem>>
    %c0_i32_27 = arith.constant 0 : i32
    %49 = tpu.memref_slice %arg2[%48, %c0_i32_27] : memref<64x128xf32, #tpu.memory_space<any>> -> memref<1x128xf32, #tpu.memory_space<any>>
    %c9_i32_28 = arith.constant 9 : i32
    %c0_i32_29 = arith.constant 0 : i32
    %50 = tpu.memref_slice %arg4[%c9_i32_28, %c0_i32_29] : memref<32x128xf32, #tpu.memory_space<vmem>> -> memref<1x128xf32, #tpu.memory_space<vmem>>
    tpu.enqueue_dma source(%49 : memref<1x128xf32, #tpu.memory_space<any>>) target(%50 : memref<1x128xf32, #tpu.memory_space<vmem>>) target_semaphore(%arg5 : memref<!tpu.dma_semaphore, #tpu.memory_space<semaphore_mem>>)
    %c10_i32 = arith.constant 10 : i32
    %51 = arith.addi %0, %c10_i32 : i32
    %52 = arith.index_cast %51 : i32 to index
    %53 = memref.load %arg1[%52] : memref<128xi32, #tpu.memory_space<smem>>
    %c0_i32_30 = arith.constant 0 : i32
    %54 = tpu.memref_slice %arg2[%53, %c0_i32_30] : memref<64x128xf32, #tpu.memory_space<any>> -> memref<1x128xf32, #tpu.memory_space<any>>
    %c10_i32_31 = arith.constant 10 : i32
    %c0_i32_32 = arith.constant 0 : i32
    %55 = tpu.memref_slice %arg4[%c10_i32_31, %c0_i32_32] : memref<32x128xf32, #tpu.memory_space<vmem>> -> memref<1x128xf32, #tpu.memory_space<vmem>>
    tpu.enqueue_dma source(%54 : memref<1x128xf32, #tpu.memory_space<any>>) target(%55 : memref<1x128xf32, #tpu.memory_space<vmem>>) target_semaphore(%arg5 : memref<!tpu.dma_semaphore, #tpu.memory_space<semaphore_mem>>)
    %c11_i32 = arith.constant 11 : i32
    %56 = arith.addi %0, %c11_i32 : i32
    %57 = arith.index_cast %56 : i32 to index
    %58 = memref.load %arg1[%57] : memref<128xi32, #tpu.memory_space<smem>>
    %c0_i32_33 = arith.constant 0 : i32
    %59 = tpu.memref_slice %arg2[%58, %c0_i32_33] : memref<64x128xf32, #tpu.memory_space<any>> -> memref<1x128xf32, #tpu.memory_space<any>>
    %c11_i32_34 = arith.constant 11 : i32
    %c0_i32_35 = arith.constant 0 : i32
    %60 = tpu.memref_slice %arg4[%c11_i32_34, %c0_i32_35] : memref<32x128xf32, #tpu.memory_space<vmem>> -> memref<1x128xf32, #tpu.memory_space<vmem>>
    tpu.enqueue_dma source(%59 : memref<1x128xf32, #tpu.memory_space<any>>) target(%60 : memref<1x128xf32, #tpu.memory_space<vmem>>) target_semaphore(%arg5 : memref<!tpu.dma_semaphore, #tpu.memory_space<semaphore_mem>>)
    %c12_i32 = arith.constant 12 : i32
    %61 = arith.addi %0, %c12_i32 : i32
    %62 = arith.index_cast %61 : i32 to index
    %63 = memref.load %arg1[%62] : memref<128xi32, #tpu.memory_space<smem>>
    %c0_i32_36 = arith.constant 0 : i32
    %64 = tpu.memref_slice %arg2[%63, %c0_i32_36] : memref<64x128xf32, #tpu.memory_space<any>> -> memref<1x128xf32, #tpu.memory_space<any>>
    %c12_i32_37 = arith.constant 12 : i32
    %c0_i32_38 = arith.constant 0 : i32
    %65 = tpu.memref_slice %arg4[%c12_i32_37, %c0_i32_38] : memref<32x128xf32, #tpu.memory_space<vmem>> -> memref<1x128xf32, #tpu.memory_space<vmem>>
    tpu.enqueue_dma source(%64 : memref<1x128xf32, #tpu.memory_space<any>>) target(%65 : memref<1x128xf32, #tpu.memory_space<vmem>>) target_semaphore(%arg5 : memref<!tpu.dma_semaphore, #tpu.memory_space<semaphore_mem>>)
    %c13_i32 = arith.constant 13 : i32
    %66 = arith.addi %0, %c13_i32 : i32
    %67 = arith.index_cast %66 : i32 to index
    %68 = memref.load %arg1[%67] : memref<128xi32, #tpu.memory_space<smem>>
    %c0_i32_39 = arith.constant 0 : i32
    %69 = tpu.memref_slice %arg2[%68, %c0_i32_39] : memref<64x128xf32, #tpu.memory_space<any>> -> memref<1x128xf32, #tpu.memory_space<any>>
    %c13_i32_40 = arith.constant 13 : i32
    %c0_i32_41 = arith.constant 0 : i32
    %70 = tpu.memref_slice %arg4[%c13_i32_40, %c0_i32_41] : memref<32x128xf32, #tpu.memory_space<vmem>> -> memref<1x128xf32, #tpu.memory_space<vmem>>
    tpu.enqueue_dma source(%69 : memref<1x128xf32, #tpu.memory_space<any>>) target(%70 : memref<1x128xf32, #tpu.memory_space<vmem>>) target_semaphore(%arg5 : memref<!tpu.dma_semaphore, #tpu.memory_space<semaphore_mem>>)
    %c14_i32 = arith.constant 14 : i32
    %71 = arith.addi %0, %c14_i32 : i32
    %72 = arith.index_cast %71 : i32 to index
    %73 = memref.load %arg1[%72] : memref<128xi32, #tpu.memory_space<smem>>
    %c0_i32_42 = arith.constant 0 : i32
    %74 = tpu.memref_slice %arg2[%73, %c0_i32_42] : memref<64x128xf32, #tpu.memory_space<any>> -> memref<1x128xf32, #tpu.memory_space<any>>
    %c14_i32_43 = arith.constant 14 : i32
    %c0_i32_44 = arith.constant 0 : i32
    %75 = tpu.memref_slice %arg4[%c14_i32_43, %c0_i32_44] : memref<32x128xf32, #tpu.memory_space<vmem>> -> memref<1x128xf32, #tpu.memory_space<vmem>>
    tpu.enqueue_dma source(%74 : memref<1x128xf32, #tpu.memory_space<any>>) target(%75 : memref<1x128xf32, #tpu.memory_space<vmem>>) target_semaphore(%arg5 : memref<!tpu.dma_semaphore, #tpu.memory_space<semaphore_mem>>)
    %c15_i32 = arith.constant 15 : i32
    %76 = arith.addi %0, %c15_i32 : i32
    %77 = arith.index_cast %76 : i32 to index
    %78 = memref.load %arg1[%77] : memref<128xi32, #tpu.memory_space<smem>>
    %c0_i32_45 = arith.constant 0 : i32
    %79 = tpu.memref_slice %arg2[%78, %c0_i32_45] : memref<64x128xf32, #tpu.memory_space<any>> -> memref<1x128xf32, #tpu.memory_space<any>>
    %c15_i32_46 = arith.constant 15 : i32
    %c0_i32_47 = arith.constant 0 : i32
    %80 = tpu.memref_slice %arg4[%c15_i32_46, %c0_i32_47] : memref<32x128xf32, #tpu.memory_space<vmem>> -> memref<1x128xf32, #tpu.memory_space<vmem>>
    tpu.enqueue_dma source(%79 : memref<1x128xf32, #tpu.memory_space<any>>) target(%80 : memref<1x128xf32, #tpu.memory_space<vmem>>) target_semaphore(%arg5 : memref<!tpu.dma_semaphore, #tpu.memory_space<semaphore_mem>>)
    %c16_i32 = arith.constant 16 : i32
    %81 = arith.addi %0, %c16_i32 : i32
    %82 = arith.index_cast %81 : i32 to index
    %83 = memref.load %arg1[%82] : memref<128xi32, #tpu.memory_space<smem>>
    %c0_i32_48 = arith.constant 0 : i32
    %84 = tpu.memref_slice %arg2[%83, %c0_i32_48] : memref<64x128xf32, #tpu.memory_space<any>> -> memref<1x128xf32, #tpu.memory_space<any>>
    %c16_i32_49 = arith.constant 16 : i32
    %c0_i32_50 = arith.constant 0 : i32
    %85 = tpu.memref_slice %arg4[%c16_i32_49, %c0_i32_50] : memref<32x128xf32, #tpu.memory_space<vmem>> -> memref<1x128xf32, #tpu.memory_space<vmem>>
    tpu.enqueue_dma source(%84 : memref<1x128xf32, #tpu.memory_space<any>>) target(%85 : memref<1x128xf32, #tpu.memory_space<vmem>>) target_semaphore(%arg5 : memref<!tpu.dma_semaphore, #tpu.memory_space<semaphore_mem>>)
    %c17_i32 = arith.constant 17 : i32
    %86 = arith.addi %0, %c17_i32 : i32
    %87 = arith.index_cast %86 : i32 to index
    %88 = memref.load %arg1[%87] : memref<128xi32, #tpu.memory_space<smem>>
    %c0_i32_51 = arith.constant 0 : i32
    %89 = tpu.memref_slice %arg2[%88, %c0_i32_51] : memref<64x128xf32, #tpu.memory_space<any>> -> memref<1x128xf32, #tpu.memory_space<any>>
    %c17_i32_52 = arith.constant 17 : i32
    %c0_i32_53 = arith.constant 0 : i32
    %90 = tpu.memref_slice %arg4[%c17_i32_52, %c0_i32_53] : memref<32x128xf32, #tpu.memory_space<vmem>> -> memref<1x128xf32, #tpu.memory_space<vmem>>
    tpu.enqueue_dma source(%89 : memref<1x128xf32, #tpu.memory_space<any>>) target(%90 : memref<1x128xf32, #tpu.memory_space<vmem>>) target_semaphore(%arg5 : memref<!tpu.dma_semaphore, #tpu.memory_space<semaphore_mem>>)
    %c18_i32 = arith.constant 18 : i32
    %91 = arith.addi %0, %c18_i32 : i32
    %92 = arith.index_cast %91 : i32 to index
    %93 = memref.load %arg1[%92] : memref<128xi32, #tpu.memory_space<smem>>
    %c0_i32_54 = arith.constant 0 : i32
    %94 = tpu.memref_slice %arg2[%93, %c0_i32_54] : memref<64x128xf32, #tpu.memory_space<any>> -> memref<1x128xf32, #tpu.memory_space<any>>
    %c18_i32_55 = arith.constant 18 : i32
    %c0_i32_56 = arith.constant 0 : i32
    %95 = tpu.memref_slice %arg4[%c18_i32_55, %c0_i32_56] : memref<32x128xf32, #tpu.memory_space<vmem>> -> memref<1x128xf32, #tpu.memory_space<vmem>>
    tpu.enqueue_dma source(%94 : memref<1x128xf32, #tpu.memory_space<any>>) target(%95 : memref<1x128xf32, #tpu.memory_space<vmem>>) target_semaphore(%arg5 : memref<!tpu.dma_semaphore, #tpu.memory_space<semaphore_mem>>)
    %c19_i32 = arith.constant 19 : i32
    %96 = arith.addi %0, %c19_i32 : i32
    %97 = arith.index_cast %96 : i32 to index
    %98 = memref.load %arg1[%97] : memref<128xi32, #tpu.memory_space<smem>>
    %c0_i32_57 = arith.constant 0 : i32
    %99 = tpu.memref_slice %arg2[%98, %c0_i32_57] : memref<64x128xf32, #tpu.memory_space<any>> -> memref<1x128xf32, #tpu.memory_space<any>>
    %c19_i32_58 = arith.constant 19 : i32
    %c0_i32_59 = arith.constant 0 : i32
    %100 = tpu.memref_slice %arg4[%c19_i32_58, %c0_i32_59] : memref<32x128xf32, #tpu.memory_space<vmem>> -> memref<1x128xf32, #tpu.memory_space<vmem>>
    tpu.enqueue_dma source(%99 : memref<1x128xf32, #tpu.memory_space<any>>) target(%100 : memref<1x128xf32, #tpu.memory_space<vmem>>) target_semaphore(%arg5 : memref<!tpu.dma_semaphore, #tpu.memory_space<semaphore_mem>>)
    %c20_i32 = arith.constant 20 : i32
    %101 = arith.addi %0, %c20_i32 : i32
    %102 = arith.index_cast %101 : i32 to index
    %103 = memref.load %arg1[%102] : memref<128xi32, #tpu.memory_space<smem>>
    %c0_i32_60 = arith.constant 0 : i32
    %104 = tpu.memref_slice %arg2[%103, %c0_i32_60] : memref<64x128xf32, #tpu.memory_space<any>> -> memref<1x128xf32, #tpu.memory_space<any>>
    %c20_i32_61 = arith.constant 20 : i32
    %c0_i32_62 = arith.constant 0 : i32
    %105 = tpu.memref_slice %arg4[%c20_i32_61, %c0_i32_62] : memref<32x128xf32, #tpu.memory_space<vmem>> -> memref<1x128xf32, #tpu.memory_space<vmem>>
    tpu.enqueue_dma source(%104 : memref<1x128xf32, #tpu.memory_space<any>>) target(%105 : memref<1x128xf32, #tpu.memory_space<vmem>>) target_semaphore(%arg5 : memref<!tpu.dma_semaphore, #tpu.memory_space<semaphore_mem>>)
    %c21_i32 = arith.constant 21 : i32
    %106 = arith.addi %0, %c21_i32 : i32
    %107 = arith.index_cast %106 : i32 to index
    %108 = memref.load %arg1[%107] : memref<128xi32, #tpu.memory_space<smem>>
    %c0_i32_63 = arith.constant 0 : i32
    %109 = tpu.memref_slice %arg2[%108, %c0_i32_63] : memref<64x128xf32, #tpu.memory_space<any>> -> memref<1x128xf32, #tpu.memory_space<any>>
    %c21_i32_64 = arith.constant 21 : i32
    %c0_i32_65 = arith.constant 0 : i32
    %110 = tpu.memref_slice %arg4[%c21_i32_64, %c0_i32_65] : memref<32x128xf32, #tpu.memory_space<vmem>> -> memref<1x128xf32, #tpu.memory_space<vmem>>
    tpu.enqueue_dma source(%109 : memref<1x128xf32, #tpu.memory_space<any>>) target(%110 : memref<1x128xf32, #tpu.memory_space<vmem>>) target_semaphore(%arg5 : memref<!tpu.dma_semaphore, #tpu.memory_space<semaphore_mem>>)
    %c22_i32 = arith.constant 22 : i32
    %111 = arith.addi %0, %c22_i32 : i32
    %112 = arith.index_cast %111 : i32 to index
    %113 = memref.load %arg1[%112] : memref<128xi32, #tpu.memory_space<smem>>
    %c0_i32_66 = arith.constant 0 : i32
    %114 = tpu.memref_slice %arg2[%113, %c0_i32_66] : memref<64x128xf32, #tpu.memory_space<any>> -> memref<1x128xf32, #tpu.memory_space<any>>
    %c22_i32_67 = arith.constant 22 : i32
    %c0_i32_68 = arith.constant 0 : i32
    %115 = tpu.memref_slice %arg4[%c22_i32_67, %c0_i32_68] : memref<32x128xf32, #tpu.memory_space<vmem>> -> memref<1x128xf32, #tpu.memory_space<vmem>>
    tpu.enqueue_dma source(%114 : memref<1x128xf32, #tpu.memory_space<any>>) target(%115 : memref<1x128xf32, #tpu.memory_space<vmem>>) target_semaphore(%arg5 : memref<!tpu.dma_semaphore, #tpu.memory_space<semaphore_mem>>)
    %c23_i32 = arith.constant 23 : i32
    %116 = arith.addi %0, %c23_i32 : i32
    %117 = arith.index_cast %116 : i32 to index
    %118 = memref.load %arg1[%117] : memref<128xi32, #tpu.memory_space<smem>>
    %c0_i32_69 = arith.constant 0 : i32
    %119 = tpu.memref_slice %arg2[%118, %c0_i32_69] : memref<64x128xf32, #tpu.memory_space<any>> -> memref<1x128xf32, #tpu.memory_space<any>>
    %c23_i32_70 = arith.constant 23 : i32
    %c0_i32_71 = arith.constant 0 : i32
    %120 = tpu.memref_slice %arg4[%c23_i32_70, %c0_i32_71] : memref<32x128xf32, #tpu.memory_space<vmem>> -> memref<1x128xf32, #tpu.memory_space<vmem>>
    tpu.enqueue_dma source(%119 : memref<1x128xf32, #tpu.memory_space<any>>) target(%120 : memref<1x128xf32, #tpu.memory_space<vmem>>) target_semaphore(%arg5 : memref<!tpu.dma_semaphore, #tpu.memory_space<semaphore_mem>>)
    %c24_i32 = arith.constant 24 : i32
    %121 = arith.addi %0, %c24_i32 : i32
    %122 = arith.index_cast %121 : i32 to index
    %123 = memref.load %arg1[%122] : memref<128xi32, #tpu.memory_space<smem>>
    %c0_i32_72 = arith.constant 0 : i32
    %124 = tpu.memref_slice %arg2[%123, %c0_i32_72] : memref<64x128xf32, #tpu.memory_space<any>> -> memref<1x128xf32, #tpu.memory_space<any>>
    %c24_i32_73 = arith.constant 24 : i32
    %c0_i32_74 = arith.constant 0 : i32
    %125 = tpu.memref_slice %arg4[%c24_i32_73, %c0_i32_74] : memref<32x128xf32, #tpu.memory_space<vmem>> -> memref<1x128xf32, #tpu.memory_space<vmem>>
    tpu.enqueue_dma source(%124 : memref<1x128xf32, #tpu.memory_space<any>>) target(%125 : memref<1x128xf32, #tpu.memory_space<vmem>>) target_semaphore(%arg5 : memref<!tpu.dma_semaphore, #tpu.memory_space<semaphore_mem>>)
    %c25_i32 = arith.constant 25 : i32
    %126 = arith.addi %0, %c25_i32 : i32
    %127 = arith.index_cast %126 : i32 to index
    %128 = memref.load %arg1[%127] : memref<128xi32, #tpu.memory_space<smem>>
    %c0_i32_75 = arith.constant 0 : i32
    %129 = tpu.memref_slice %arg2[%128, %c0_i32_75] : memref<64x128xf32, #tpu.memory_space<any>> -> memref<1x128xf32, #tpu.memory_space<any>>
    %c25_i32_76 = arith.constant 25 : i32
    %c0_i32_77 = arith.constant 0 : i32
    %130 = tpu.memref_slice %arg4[%c25_i32_76, %c0_i32_77] : memref<32x128xf32, #tpu.memory_space<vmem>> -> memref<1x128xf32, #tpu.memory_space<vmem>>
    tpu.enqueue_dma source(%129 : memref<1x128xf32, #tpu.memory_space<any>>) target(%130 : memref<1x128xf32, #tpu.memory_space<vmem>>) target_semaphore(%arg5 : memref<!tpu.dma_semaphore, #tpu.memory_space<semaphore_mem>>)
    %c26_i32 = arith.constant 26 : i32
    %131 = arith.addi %0, %c26_i32 : i32
    %132 = arith.index_cast %131 : i32 to index
    %133 = memref.load %arg1[%132] : memref<128xi32, #tpu.memory_space<smem>>
    %c0_i32_78 = arith.constant 0 : i32
    %134 = tpu.memref_slice %arg2[%133, %c0_i32_78] : memref<64x128xf32, #tpu.memory_space<any>> -> memref<1x128xf32, #tpu.memory_space<any>>
    %c26_i32_79 = arith.constant 26 : i32
    %c0_i32_80 = arith.constant 0 : i32
    %135 = tpu.memref_slice %arg4[%c26_i32_79, %c0_i32_80] : memref<32x128xf32, #tpu.memory_space<vmem>> -> memref<1x128xf32, #tpu.memory_space<vmem>>
    tpu.enqueue_dma source(%134 : memref<1x128xf32, #tpu.memory_space<any>>) target(%135 : memref<1x128xf32, #tpu.memory_space<vmem>>) target_semaphore(%arg5 : memref<!tpu.dma_semaphore, #tpu.memory_space<semaphore_mem>>)
    %c27_i32 = arith.constant 27 : i32
    %136 = arith.addi %0, %c27_i32 : i32
    %137 = arith.index_cast %136 : i32 to index
    %138 = memref.load %arg1[%137] : memref<128xi32, #tpu.memory_space<smem>>
    %c0_i32_81 = arith.constant 0 : i32
    %139 = tpu.memref_slice %arg2[%138, %c0_i32_81] : memref<64x128xf32, #tpu.memory_space<any>> -> memref<1x128xf32, #tpu.memory_space<any>>
    %c27_i32_82 = arith.constant 27 : i32
    %c0_i32_83 = arith.constant 0 : i32
    %140 = tpu.memref_slice %arg4[%c27_i32_82, %c0_i32_83] : memref<32x128xf32, #tpu.memory_space<vmem>> -> memref<1x128xf32, #tpu.memory_space<vmem>>
    tpu.enqueue_dma source(%139 : memref<1x128xf32, #tpu.memory_space<any>>) target(%140 : memref<1x128xf32, #tpu.memory_space<vmem>>) target_semaphore(%arg5 : memref<!tpu.dma_semaphore, #tpu.memory_space<semaphore_mem>>)
    %c28_i32 = arith.constant 28 : i32
    %141 = arith.addi %0, %c28_i32 : i32
    %142 = arith.index_cast %141 : i32 to index
    %143 = memref.load %arg1[%142] : memref<128xi32, #tpu.memory_space<smem>>
    %c0_i32_84 = arith.constant 0 : i32
    %144 = tpu.memref_slice %arg2[%143, %c0_i32_84] : memref<64x128xf32, #tpu.memory_space<any>> -> memref<1x128xf32, #tpu.memory_space<any>>
    %c28_i32_85 = arith.constant 28 : i32
    %c0_i32_86 = arith.constant 0 : i32
    %145 = tpu.memref_slice %arg4[%c28_i32_85, %c0_i32_86] : memref<32x128xf32, #tpu.memory_space<vmem>> -> memref<1x128xf32, #tpu.memory_space<vmem>>
    tpu.enqueue_dma source(%144 : memref<1x128xf32, #tpu.memory_space<any>>) target(%145 : memref<1x128xf32, #tpu.memory_space<vmem>>) target_semaphore(%arg5 : memref<!tpu.dma_semaphore, #tpu.memory_space<semaphore_mem>>)
    %c29_i32 = arith.constant 29 : i32
    %146 = arith.addi %0, %c29_i32 : i32
    %147 = arith.index_cast %146 : i32 to index
    %148 = memref.load %arg1[%147] : memref<128xi32, #tpu.memory_space<smem>>
    %c0_i32_87 = arith.constant 0 : i32
    %149 = tpu.memref_slice %arg2[%148, %c0_i32_87] : memref<64x128xf32, #tpu.memory_space<any>> -> memref<1x128xf32, #tpu.memory_space<any>>
    %c29_i32_88 = arith.constant 29 : i32
    %c0_i32_89 = arith.constant 0 : i32
    %150 = tpu.memref_slice %arg4[%c29_i32_88, %c0_i32_89] : memref<32x128xf32, #tpu.memory_space<vmem>> -> memref<1x128xf32, #tpu.memory_space<vmem>>
    tpu.enqueue_dma source(%149 : memref<1x128xf32, #tpu.memory_space<any>>) target(%150 : memref<1x128xf32, #tpu.memory_space<vmem>>) target_semaphore(%arg5 : memref<!tpu.dma_semaphore, #tpu.memory_space<semaphore_mem>>)
    %c30_i32 = arith.constant 30 : i32
    %151 = arith.addi %0, %c30_i32 : i32
    %152 = arith.index_cast %151 : i32 to index
    %153 = memref.load %arg1[%152] : memref<128xi32, #tpu.memory_space<smem>>
    %c0_i32_90 = arith.constant 0 : i32
    %154 = tpu.memref_slice %arg2[%153, %c0_i32_90] : memref<64x128xf32, #tpu.memory_space<any>> -> memref<1x128xf32, #tpu.memory_space<any>>
    %c30_i32_91 = arith.constant 30 : i32
    %c0_i32_92 = arith.constant 0 : i32
    %155 = tpu.memref_slice %arg4[%c30_i32_91, %c0_i32_92] : memref<32x128xf32, #tpu.memory_space<vmem>> -> memref<1x128xf32, #tpu.memory_space<vmem>>
    tpu.enqueue_dma source(%154 : memref<1x128xf32, #tpu.memory_space<any>>) target(%155 : memref<1x128xf32, #tpu.memory_space<vmem>>) target_semaphore(%arg5 : memref<!tpu.dma_semaphore, #tpu.memory_space<semaphore_mem>>)
    %c31_i32 = arith.constant 31 : i32
    %156 = arith.addi %0, %c31_i32 : i32
    %157 = arith.index_cast %156 : i32 to index
    %158 = memref.load %arg1[%157] : memref<128xi32, #tpu.memory_space<smem>>
    %c0_i32_93 = arith.constant 0 : i32
    %159 = tpu.memref_slice %arg2[%158, %c0_i32_93] : memref<64x128xf32, #tpu.memory_space<any>> -> memref<1x128xf32, #tpu.memory_space<any>>
    %c31_i32_94 = arith.constant 31 : i32
    %c0_i32_95 = arith.constant 0 : i32
    %160 = tpu.memref_slice %arg4[%c31_i32_94, %c0_i32_95] : memref<32x128xf32, #tpu.memory_space<vmem>> -> memref<1x128xf32, #tpu.memory_space<vmem>>
    tpu.enqueue_dma source(%159 : memref<1x128xf32, #tpu.memory_space<any>>) target(%160 : memref<1x128xf32, #tpu.memory_space<vmem>>) target_semaphore(%arg5 : memref<!tpu.dma_semaphore, #tpu.memory_space<semaphore_mem>>)
    %c0_i32_96 = arith.constant 0 : i32
    %161 = tpu.memref_slice %arg2[%3, %c0_i32_96] : memref<64x128xf32, #tpu.memory_space<any>> -> memref<1x128xf32, #tpu.memory_space<any>>
    %c0_i32_97 = arith.constant 0 : i32
    %c0_i32_98 = arith.constant 0 : i32
    %162 = tpu.memref_slice %arg4[%c0_i32_97, %c0_i32_98] : memref<32x128xf32, #tpu.memory_space<vmem>> -> memref<1x128xf32, #tpu.memory_space<vmem>>
    tpu.wait_dma2 semaphore(%arg5 : memref<!tpu.dma_semaphore, #tpu.memory_space<semaphore_mem>>) src(%161 : memref<1x128xf32, #tpu.memory_space<any>>) dst(%162 : memref<1x128xf32, #tpu.memory_space<vmem>>)
    %c0_i32_99 = arith.constant 0 : i32
    %163 = tpu.memref_slice %arg2[%8, %c0_i32_99] : memref<64x128xf32, #tpu.memory_space<any>> -> memref<1x128xf32, #tpu.memory_space<any>>
    %c1_i32_100 = arith.constant 1 : i32
    %c0_i32_101 = arith.constant 0 : i32
    %164 = tpu.memref_slice %arg4[%c1_i32_100, %c0_i32_101] : memref<32x128xf32, #tpu.memory_space<vmem>> -> memref<1x128xf32, #tpu.memory_space<vmem>>
    tpu.wait_dma2 semaphore(%arg5 : memref<!tpu.dma_semaphore, #tpu.memory_space<semaphore_mem>>) src(%163 : memref<1x128xf32, #tpu.memory_space<any>>) dst(%164 : memref<1x128xf32, #tpu.memory_space<vmem>>)
    %c0_i32_102 = arith.constant 0 : i32
    %165 = tpu.memref_slice %arg2[%13, %c0_i32_102] : memref<64x128xf32, #tpu.memory_space<any>> -> memref<1x128xf32, #tpu.memory_space<any>>
    %c2_i32_103 = arith.constant 2 : i32
    %c0_i32_104 = arith.constant 0 : i32
    %166 = tpu.memref_slice %arg4[%c2_i32_103, %c0_i32_104] : memref<32x128xf32, #tpu.memory_space<vmem>> -> memref<1x128xf32, #tpu.memory_space<vmem>>
    tpu.wait_dma2 semaphore(%arg5 : memref<!tpu.dma_semaphore, #tpu.memory_space<semaphore_mem>>) src(%165 : memref<1x128xf32, #tpu.memory_space<any>>) dst(%166 : memref<1x128xf32, #tpu.memory_space<vmem>>)
    %c0_i32_105 = arith.constant 0 : i32
    %167 = tpu.memref_slice %arg2[%18, %c0_i32_105] : memref<64x128xf32, #tpu.memory_space<any>> -> memref<1x128xf32, #tpu.memory_space<any>>
    %c3_i32_106 = arith.constant 3 : i32
    %c0_i32_107 = arith.constant 0 : i32
    %168 = tpu.memref_slice %arg4[%c3_i32_106, %c0_i32_107] : memref<32x128xf32, #tpu.memory_space<vmem>> -> memref<1x128xf32, #tpu.memory_space<vmem>>
    tpu.wait_dma2 semaphore(%arg5 : memref<!tpu.dma_semaphore, #tpu.memory_space<semaphore_mem>>) src(%167 : memref<1x128xf32, #tpu.memory_space<any>>) dst(%168 : memref<1x128xf32, #tpu.memory_space<vmem>>)
    %c0_i32_108 = arith.constant 0 : i32
    %169 = tpu.memref_slice %arg2[%23, %c0_i32_108] : memref<64x128xf32, #tpu.memory_space<any>> -> memref<1x128xf32, #tpu.memory_space<any>>
    %c4_i32_109 = arith.constant 4 : i32
    %c0_i32_110 = arith.constant 0 : i32
    %170 = tpu.memref_slice %arg4[%c4_i32_109, %c0_i32_110] : memref<32x128xf32, #tpu.memory_space<vmem>> -> memref<1x128xf32, #tpu.memory_space<vmem>>
    tpu.wait_dma2 semaphore(%arg5 : memref<!tpu.dma_semaphore, #tpu.memory_space<semaphore_mem>>) src(%169 : memref<1x128xf32, #tpu.memory_space<any>>) dst(%170 : memref<1x128xf32, #tpu.memory_space<vmem>>)
    %c0_i32_111 = arith.constant 0 : i32
    %171 = tpu.memref_slice %arg2[%28, %c0_i32_111] : memref<64x128xf32, #tpu.memory_space<any>> -> memref<1x128xf32, #tpu.memory_space<any>>
    %c5_i32_112 = arith.constant 5 : i32
    %c0_i32_113 = arith.constant 0 : i32
    %172 = tpu.memref_slice %arg4[%c5_i32_112, %c0_i32_113] : memref<32x128xf32, #tpu.memory_space<vmem>> -> memref<1x128xf32, #tpu.memory_space<vmem>>
    tpu.wait_dma2 semaphore(%arg5 : memref<!tpu.dma_semaphore, #tpu.memory_space<semaphore_mem>>) src(%171 : memref<1x128xf32, #tpu.memory_space<any>>) dst(%172 : memref<1x128xf32, #tpu.memory_space<vmem>>)
    %c0_i32_114 = arith.constant 0 : i32
    %173 = tpu.memref_slice %arg2[%33, %c0_i32_114] : memref<64x128xf32, #tpu.memory_space<any>> -> memref<1x128xf32, #tpu.memory_space<any>>
    %c6_i32_115 = arith.constant 6 : i32
    %c0_i32_116 = arith.constant 0 : i32
    %174 = tpu.memref_slice %arg4[%c6_i32_115, %c0_i32_116] : memref<32x128xf32, #tpu.memory_space<vmem>> -> memref<1x128xf32, #tpu.memory_space<vmem>>
    tpu.wait_dma2 semaphore(%arg5 : memref<!tpu.dma_semaphore, #tpu.memory_space<semaphore_mem>>) src(%173 : memref<1x128xf32, #tpu.memory_space<any>>) dst(%174 : memref<1x128xf32, #tpu.memory_space<vmem>>)
    %c0_i32_117 = arith.constant 0 : i32
    %175 = tpu.memref_slice %arg2[%38, %c0_i32_117] : memref<64x128xf32, #tpu.memory_space<any>> -> memref<1x128xf32, #tpu.memory_space<any>>
    %c7_i32_118 = arith.constant 7 : i32
    %c0_i32_119 = arith.constant 0 : i32
    %176 = tpu.memref_slice %arg4[%c7_i32_118, %c0_i32_119] : memref<32x128xf32, #tpu.memory_space<vmem>> -> memref<1x128xf32, #tpu.memory_space<vmem>>
    tpu.wait_dma2 semaphore(%arg5 : memref<!tpu.dma_semaphore, #tpu.memory_space<semaphore_mem>>) src(%175 : memref<1x128xf32, #tpu.memory_space<any>>) dst(%176 : memref<1x128xf32, #tpu.memory_space<vmem>>)
    %c0_i32_120 = arith.constant 0 : i32
    %177 = tpu.memref_slice %arg2[%43, %c0_i32_120] : memref<64x128xf32, #tpu.memory_space<any>> -> memref<1x128xf32, #tpu.memory_space<any>>
    %c8_i32_121 = arith.constant 8 : i32
    %c0_i32_122 = arith.constant 0 : i32
    %178 = tpu.memref_slice %arg4[%c8_i32_121, %c0_i32_122] : memref<32x128xf32, #tpu.memory_space<vmem>> -> memref<1x128xf32, #tpu.memory_space<vmem>>
    tpu.wait_dma2 semaphore(%arg5 : memref<!tpu.dma_semaphore, #tpu.memory_space<semaphore_mem>>) src(%177 : memref<1x128xf32, #tpu.memory_space<any>>) dst(%178 : memref<1x128xf32, #tpu.memory_space<vmem>>)
    %c0_i32_123 = arith.constant 0 : i32
    %179 = tpu.memref_slice %arg2[%48, %c0_i32_123] : memref<64x128xf32, #tpu.memory_space<any>> -> memref<1x128xf32, #tpu.memory_space<any>>
    %c9_i32_124 = arith.constant 9 : i32
    %c0_i32_125 = arith.constant 0 : i32
    %180 = tpu.memref_slice %arg4[%c9_i32_124, %c0_i32_125] : memref<32x128xf32, #tpu.memory_space<vmem>> -> memref<1x128xf32, #tpu.memory_space<vmem>>
    tpu.wait_dma2 semaphore(%arg5 : memref<!tpu.dma_semaphore, #tpu.memory_space<semaphore_mem>>) src(%179 : memref<1x128xf32, #tpu.memory_space<any>>) dst(%180 : memref<1x128xf32, #tpu.memory_space<vmem>>)
    %c0_i32_126 = arith.constant 0 : i32
    %181 = tpu.memref_slice %arg2[%53, %c0_i32_126] : memref<64x128xf32, #tpu.memory_space<any>> -> memref<1x128xf32, #tpu.memory_space<any>>
    %c10_i32_127 = arith.constant 10 : i32
    %c0_i32_128 = arith.constant 0 : i32
    %182 = tpu.memref_slice %arg4[%c10_i32_127, %c0_i32_128] : memref<32x128xf32, #tpu.memory_space<vmem>> -> memref<1x128xf32, #tpu.memory_space<vmem>>
    tpu.wait_dma2 semaphore(%arg5 : memref<!tpu.dma_semaphore, #tpu.memory_space<semaphore_mem>>) src(%181 : memref<1x128xf32, #tpu.memory_space<any>>) dst(%182 : memref<1x128xf32, #tpu.memory_space<vmem>>)
    %c0_i32_129 = arith.constant 0 : i32
    %183 = tpu.memref_slice %arg2[%58, %c0_i32_129] : memref<64x128xf32, #tpu.memory_space<any>> -> memref<1x128xf32, #tpu.memory_space<any>>
    %c11_i32_130 = arith.constant 11 : i32
    %c0_i32_131 = arith.constant 0 : i32
    %184 = tpu.memref_slice %arg4[%c11_i32_130, %c0_i32_131] : memref<32x128xf32, #tpu.memory_space<vmem>> -> memref<1x128xf32, #tpu.memory_space<vmem>>
    tpu.wait_dma2 semaphore(%arg5 : memref<!tpu.dma_semaphore, #tpu.memory_space<semaphore_mem>>) src(%183 : memref<1x128xf32, #tpu.memory_space<any>>) dst(%184 : memref<1x128xf32, #tpu.memory_space<vmem>>)
    %c0_i32_132 = arith.constant 0 : i32
    %185 = tpu.memref_slice %arg2[%63, %c0_i32_132] : memref<64x128xf32, #tpu.memory_space<any>> -> memref<1x128xf32, #tpu.memory_space<any>>
    %c12_i32_133 = arith.constant 12 : i32
    %c0_i32_134 = arith.constant 0 : i32
    %186 = tpu.memref_slice %arg4[%c12_i32_133, %c0_i32_134] : memref<32x128xf32, #tpu.memory_space<vmem>> -> memref<1x128xf32, #tpu.memory_space<vmem>>
    tpu.wait_dma2 semaphore(%arg5 : memref<!tpu.dma_semaphore, #tpu.memory_space<semaphore_mem>>) src(%185 : memref<1x128xf32, #tpu.memory_space<any>>) dst(%186 : memref<1x128xf32, #tpu.memory_space<vmem>>)
    %c0_i32_135 = arith.constant 0 : i32
    %187 = tpu.memref_slice %arg2[%68, %c0_i32_135] : memref<64x128xf32, #tpu.memory_space<any>> -> memref<1x128xf32, #tpu.memory_space<any>>
    %c13_i32_136 = arith.constant 13 : i32
    %c0_i32_137 = arith.constant 0 : i32
    %188 = tpu.memref_slice %arg4[%c13_i32_136, %c0_i32_137] : memref<32x128xf32, #tpu.memory_space<vmem>> -> memref<1x128xf32, #tpu.memory_space<vmem>>
    tpu.wait_dma2 semaphore(%arg5 : memref<!tpu.dma_semaphore, #tpu.memory_space<semaphore_mem>>) src(%187 : memref<1x128xf32, #tpu.memory_space<any>>) dst(%188 : memref<1x128xf32, #tpu.memory_space<vmem>>)
    %c0_i32_138 = arith.constant 0 : i32
    %189 = tpu.memref_slice %arg2[%73, %c0_i32_138] : memref<64x128xf32, #tpu.memory_space<any>> -> memref<1x128xf32, #tpu.memory_space<any>>
    %c14_i32_139 = arith.constant 14 : i32
    %c0_i32_140 = arith.constant 0 : i32
    %190 = tpu.memref_slice %arg4[%c14_i32_139, %c0_i32_140] : memref<32x128xf32, #tpu.memory_space<vmem>> -> memref<1x128xf32, #tpu.memory_space<vmem>>
    tpu.wait_dma2 semaphore(%arg5 : memref<!tpu.dma_semaphore, #tpu.memory_space<semaphore_mem>>) src(%189 : memref<1x128xf32, #tpu.memory_space<any>>) dst(%190 : memref<1x128xf32, #tpu.memory_space<vmem>>)
    %c0_i32_141 = arith.constant 0 : i32
    %191 = tpu.memref_slice %arg2[%78, %c0_i32_141] : memref<64x128xf32, #tpu.memory_space<any>> -> memref<1x128xf32, #tpu.memory_space<any>>
    %c15_i32_142 = arith.constant 15 : i32
    %c0_i32_143 = arith.constant 0 : i32
    %192 = tpu.memref_slice %arg4[%c15_i32_142, %c0_i32_143] : memref<32x128xf32, #tpu.memory_space<vmem>> -> memref<1x128xf32, #tpu.memory_space<vmem>>
    tpu.wait_dma2 semaphore(%arg5 : memref<!tpu.dma_semaphore, #tpu.memory_space<semaphore_mem>>) src(%191 : memref<1x128xf32, #tpu.memory_space<any>>) dst(%192 : memref<1x128xf32, #tpu.memory_space<vmem>>)
    %c0_i32_144 = arith.constant 0 : i32
    %193 = tpu.memref_slice %arg2[%83, %c0_i32_144] : memref<64x128xf32, #tpu.memory_space<any>> -> memref<1x128xf32, #tpu.memory_space<any>>
    %c16_i32_145 = arith.constant 16 : i32
    %c0_i32_146 = arith.constant 0 : i32
    %194 = tpu.memref_slice %arg4[%c16_i32_145, %c0_i32_146] : memref<32x128xf32, #tpu.memory_space<vmem>> -> memref<1x128xf32, #tpu.memory_space<vmem>>
    tpu.wait_dma2 semaphore(%arg5 : memref<!tpu.dma_semaphore, #tpu.memory_space<semaphore_mem>>) src(%193 : memref<1x128xf32, #tpu.memory_space<any>>) dst(%194 : memref<1x128xf32, #tpu.memory_space<vmem>>)
    %c0_i32_147 = arith.constant 0 : i32
    %195 = tpu.memref_slice %arg2[%88, %c0_i32_147] : memref<64x128xf32, #tpu.memory_space<any>> -> memref<1x128xf32, #tpu.memory_space<any>>
    %c17_i32_148 = arith.constant 17 : i32
    %c0_i32_149 = arith.constant 0 : i32
    %196 = tpu.memref_slice %arg4[%c17_i32_148, %c0_i32_149] : memref<32x128xf32, #tpu.memory_space<vmem>> -> memref<1x128xf32, #tpu.memory_space<vmem>>
    tpu.wait_dma2 semaphore(%arg5 : memref<!tpu.dma_semaphore, #tpu.memory_space<semaphore_mem>>) src(%195 : memref<1x128xf32, #tpu.memory_space<any>>) dst(%196 : memref<1x128xf32, #tpu.memory_space<vmem>>)
    %c0_i32_150 = arith.constant 0 : i32
    %197 = tpu.memref_slice %arg2[%93, %c0_i32_150] : memref<64x128xf32, #tpu.memory_space<any>> -> memref<1x128xf32, #tpu.memory_space<any>>
    %c18_i32_151 = arith.constant 18 : i32
    %c0_i32_152 = arith.constant 0 : i32
    %198 = tpu.memref_slice %arg4[%c18_i32_151, %c0_i32_152] : memref<32x128xf32, #tpu.memory_space<vmem>> -> memref<1x128xf32, #tpu.memory_space<vmem>>
    tpu.wait_dma2 semaphore(%arg5 : memref<!tpu.dma_semaphore, #tpu.memory_space<semaphore_mem>>) src(%197 : memref<1x128xf32, #tpu.memory_space<any>>) dst(%198 : memref<1x128xf32, #tpu.memory_space<vmem>>)
    %c0_i32_153 = arith.constant 0 : i32
    %199 = tpu.memref_slice %arg2[%98, %c0_i32_153] : memref<64x128xf32, #tpu.memory_space<any>> -> memref<1x128xf32, #tpu.memory_space<any>>
    %c19_i32_154 = arith.constant 19 : i32
    %c0_i32_155 = arith.constant 0 : i32
    %200 = tpu.memref_slice %arg4[%c19_i32_154, %c0_i32_155] : memref<32x128xf32, #tpu.memory_space<vmem>> -> memref<1x128xf32, #tpu.memory_space<vmem>>
    tpu.wait_dma2 semaphore(%arg5 : memref<!tpu.dma_semaphore, #tpu.memory_space<semaphore_mem>>) src(%199 : memref<1x128xf32, #tpu.memory_space<any>>) dst(%200 : memref<1x128xf32, #tpu.memory_space<vmem>>)
    %c0_i32_156 = arith.constant 0 : i32
    %201 = tpu.memref_slice %arg2[%103, %c0_i32_156] : memref<64x128xf32, #tpu.memory_space<any>> -> memref<1x128xf32, #tpu.memory_space<any>>
    %c20_i32_157 = arith.constant 20 : i32
    %c0_i32_158 = arith.constant 0 : i32
    %202 = tpu.memref_slice %arg4[%c20_i32_157, %c0_i32_158] : memref<32x128xf32, #tpu.memory_space<vmem>> -> memref<1x128xf32, #tpu.memory_space<vmem>>
    tpu.wait_dma2 semaphore(%arg5 : memref<!tpu.dma_semaphore, #tpu.memory_space<semaphore_mem>>) src(%201 : memref<1x128xf32, #tpu.memory_space<any>>) dst(%202 : memref<1x128xf32, #tpu.memory_space<vmem>>)
    %c0_i32_159 = arith.constant 0 : i32
    %203 = tpu.memref_slice %arg2[%108, %c0_i32_159] : memref<64x128xf32, #tpu.memory_space<any>> -> memref<1x128xf32, #tpu.memory_space<any>>
    %c21_i32_160 = arith.constant 21 : i32
    %c0_i32_161 = arith.constant 0 : i32
    %204 = tpu.memref_slice %arg4[%c21_i32_160, %c0_i32_161] : memref<32x128xf32, #tpu.memory_space<vmem>> -> memref<1x128xf32, #tpu.memory_space<vmem>>
    tpu.wait_dma2 semaphore(%arg5 : memref<!tpu.dma_semaphore, #tpu.memory_space<semaphore_mem>>) src(%203 : memref<1x128xf32, #tpu.memory_space<any>>) dst(%204 : memref<1x128xf32, #tpu.memory_space<vmem>>)
    %c0_i32_162 = arith.constant 0 : i32
    %205 = tpu.memref_slice %arg2[%113, %c0_i32_162] : memref<64x128xf32, #tpu.memory_space<any>> -> memref<1x128xf32, #tpu.memory_space<any>>
    %c22_i32_163 = arith.constant 22 : i32
    %c0_i32_164 = arith.constant 0 : i32
    %206 = tpu.memref_slice %arg4[%c22_i32_163, %c0_i32_164] : memref<32x128xf32, #tpu.memory_space<vmem>> -> memref<1x128xf32, #tpu.memory_space<vmem>>
    tpu.wait_dma2 semaphore(%arg5 : memref<!tpu.dma_semaphore, #tpu.memory_space<semaphore_mem>>) src(%205 : memref<1x128xf32, #tpu.memory_space<any>>) dst(%206 : memref<1x128xf32, #tpu.memory_space<vmem>>)
    %c0_i32_165 = arith.constant 0 : i32
    %207 = tpu.memref_slice %arg2[%118, %c0_i32_165] : memref<64x128xf32, #tpu.memory_space<any>> -> memref<1x128xf32, #tpu.memory_space<any>>
    %c23_i32_166 = arith.constant 23 : i32
    %c0_i32_167 = arith.constant 0 : i32
    %208 = tpu.memref_slice %arg4[%c23_i32_166, %c0_i32_167] : memref<32x128xf32, #tpu.memory_space<vmem>> -> memref<1x128xf32, #tpu.memory_space<vmem>>
    tpu.wait_dma2 semaphore(%arg5 : memref<!tpu.dma_semaphore, #tpu.memory_space<semaphore_mem>>) src(%207 : memref<1x128xf32, #tpu.memory_space<any>>) dst(%208 : memref<1x128xf32, #tpu.memory_space<vmem>>)
    %c0_i32_168 = arith.constant 0 : i32
    %209 = tpu.memref_slice %arg2[%123, %c0_i32_168] : memref<64x128xf32, #tpu.memory_space<any>> -> memref<1x128xf32, #tpu.memory_space<any>>
    %c24_i32_169 = arith.constant 24 : i32
    %c0_i32_170 = arith.constant 0 : i32
    %210 = tpu.memref_slice %arg4[%c24_i32_169, %c0_i32_170] : memref<32x128xf32, #tpu.memory_space<vmem>> -> memref<1x128xf32, #tpu.memory_space<vmem>>
    tpu.wait_dma2 semaphore(%arg5 : memref<!tpu.dma_semaphore, #tpu.memory_space<semaphore_mem>>) src(%209 : memref<1x128xf32, #tpu.memory_space<any>>) dst(%210 : memref<1x128xf32, #tpu.memory_space<vmem>>)
    %c0_i32_171 = arith.constant 0 : i32
    %211 = tpu.memref_slice %arg2[%128, %c0_i32_171] : memref<64x128xf32, #tpu.memory_space<any>> -> memref<1x128xf32, #tpu.memory_space<any>>
    %c25_i32_172 = arith.constant 25 : i32
    %c0_i32_173 = arith.constant 0 : i32
    %212 = tpu.memref_slice %arg4[%c25_i32_172, %c0_i32_173] : memref<32x128xf32, #tpu.memory_space<vmem>> -> memref<1x128xf32, #tpu.memory_space<vmem>>
    tpu.wait_dma2 semaphore(%arg5 : memref<!tpu.dma_semaphore, #tpu.memory_space<semaphore_mem>>) src(%211 : memref<1x128xf32, #tpu.memory_space<any>>) dst(%212 : memref<1x128xf32, #tpu.memory_space<vmem>>)
    %c0_i32_174 = arith.constant 0 : i32
    %213 = tpu.memref_slice %arg2[%133, %c0_i32_174] : memref<64x128xf32, #tpu.memory_space<any>> -> memref<1x128xf32, #tpu.memory_space<any>>
    %c26_i32_175 = arith.constant 26 : i32
    %c0_i32_176 = arith.constant 0 : i32
    %214 = tpu.memref_slice %arg4[%c26_i32_175, %c0_i32_176] : memref<32x128xf32, #tpu.memory_space<vmem>> -> memref<1x128xf32, #tpu.memory_space<vmem>>
    tpu.wait_dma2 semaphore(%arg5 : memref<!tpu.dma_semaphore, #tpu.memory_space<semaphore_mem>>) src(%213 : memref<1x128xf32, #tpu.memory_space<any>>) dst(%214 : memref<1x128xf32, #tpu.memory_space<vmem>>)
    %c0_i32_177 = arith.constant 0 : i32
    %215 = tpu.memref_slice %arg2[%138, %c0_i32_177] : memref<64x128xf32, #tpu.memory_space<any>> -> memref<1x128xf32, #tpu.memory_space<any>>
    %c27_i32_178 = arith.constant 27 : i32
    %c0_i32_179 = arith.constant 0 : i32
    %216 = tpu.memref_slice %arg4[%c27_i32_178, %c0_i32_179] : memref<32x128xf32, #tpu.memory_space<vmem>> -> memref<1x128xf32, #tpu.memory_space<vmem>>
    tpu.wait_dma2 semaphore(%arg5 : memref<!tpu.dma_semaphore, #tpu.memory_space<semaphore_mem>>) src(%215 : memref<1x128xf32, #tpu.memory_space<any>>) dst(%216 : memref<1x128xf32, #tpu.memory_space<vmem>>)
    %c0_i32_180 = arith.constant 0 : i32
    %217 = tpu.memref_slice %arg2[%143, %c0_i32_180] : memref<64x128xf32, #tpu.memory_space<any>> -> memref<1x128xf32, #tpu.memory_space<any>>
    %c28_i32_181 = arith.constant 28 : i32
    %c0_i32_182 = arith.constant 0 : i32
    %218 = tpu.memref_slice %arg4[%c28_i32_181, %c0_i32_182] : memref<32x128xf32, #tpu.memory_space<vmem>> -> memref<1x128xf32, #tpu.memory_space<vmem>>
    tpu.wait_dma2 semaphore(%arg5 : memref<!tpu.dma_semaphore, #tpu.memory_space<semaphore_mem>>) src(%217 : memref<1x128xf32, #tpu.memory_space<any>>) dst(%218 : memref<1x128xf32, #tpu.memory_space<vmem>>)
    %c0_i32_183 = arith.constant 0 : i32
    %219 = tpu.memref_slice %arg2[%148, %c0_i32_183] : memref<64x128xf32, #tpu.memory_space<any>> -> memref<1x128xf32, #tpu.memory_space<any>>
    %c29_i32_184 = arith.constant 29 : i32
    %c0_i32_185 = arith.constant 0 : i32
    %220 = tpu.memref_slice %arg4[%c29_i32_184, %c0_i32_185] : memref<32x128xf32, #tpu.memory_space<vmem>> -> memref<1x128xf32, #tpu.memory_space<vmem>>
    tpu.wait_dma2 semaphore(%arg5 : memref<!tpu.dma_semaphore, #tpu.memory_space<semaphore_mem>>) src(%219 : memref<1x128xf32, #tpu.memory_space<any>>) dst(%220 : memref<1x128xf32, #tpu.memory_space<vmem>>)
    %c0_i32_186 = arith.constant 0 : i32
    %221 = tpu.memref_slice %arg2[%153, %c0_i32_186] : memref<64x128xf32, #tpu.memory_space<any>> -> memref<1x128xf32, #tpu.memory_space<any>>
    %c30_i32_187 = arith.constant 30 : i32
    %c0_i32_188 = arith.constant 0 : i32
    %222 = tpu.memref_slice %arg4[%c30_i32_187, %c0_i32_188] : memref<32x128xf32, #tpu.memory_space<vmem>> -> memref<1x128xf32, #tpu.memory_space<vmem>>
    tpu.wait_dma2 semaphore(%arg5 : memref<!tpu.dma_semaphore, #tpu.memory_space<semaphore_mem>>) src(%221 : memref<1x128xf32, #tpu.memory_space<any>>) dst(%222 : memref<1x128xf32, #tpu.memory_space<vmem>>)
    %c0_i32_189 = arith.constant 0 : i32
    %223 = tpu.memref_slice %arg2[%158, %c0_i32_189] : memref<64x128xf32, #tpu.memory_space<any>> -> memref<1x128xf32, #tpu.memory_space<any>>
    %c31_i32_190 = arith.constant 31 : i32
    %c0_i32_191 = arith.constant 0 : i32
    %224 = tpu.memref_slice %arg4[%c31_i32_190, %c0_i32_191] : memref<32x128xf32, #tpu.memory_space<vmem>> -> memref<1x128xf32, #tpu.memory_space<vmem>>
    tpu.wait_dma2 semaphore(%arg5 : memref<!tpu.dma_semaphore, #tpu.memory_space<semaphore_mem>>) src(%223 : memref<1x128xf32, #tpu.memory_space<any>>) dst(%224 : memref<1x128xf32, #tpu.memory_space<vmem>>)
    %c0 = arith.constant 0 : index
    %c0_192 = arith.constant 0 : index
    %225 = vector.load %arg4[%c0, %c0_192] : memref<32x128xf32, #tpu.memory_space<vmem>>, vector<32x128xf32>
    %c0_193 = arith.constant 0 : index
    %c0_194 = arith.constant 0 : index
    %226 = vector.load %arg3[%c0_193, %c0_194] : memref<32x128xf32, #tpu.memory_space<vmem>>, vector<32x128xf32>
    tpu.vector_store %arg3[%c0_193, %c0_194], %225 {strides = array<i32>} : memref<32x128xf32, #tpu.memory_space<vmem>>, vector<32x128xf32>,
    return
  }
  func.func @transform_1(%arg0: i32, %arg1: memref<128xi32, #tpu.memory_space<smem>>) -> (i32, i32) {
    %c0_i32 = arith.constant 0 : i32
    %c0_i32_0 = arith.constant 0 : i32
    return %arg0, %c0_i32 : i32, i32
  }
}

</mosaic_0001>

<llo_original>
// kernel: tpu_custom_call.1
$region0: #{tpu_custom_call.1}
  #allocation0 [shape = 'u32[]', space=smem, size = 0x4, offset = 0x4, fixed_abs, tag = 'smem constant byte address 0x4 - core index']
  #allocation1 [shape = 'u32[144,128]{1,0:T(1,128)}', space=vmem, size = 0x12000, scoped, tag = 'internal scratch']
  #allocation2 [shape = 'f32[32,128]{1,0:T(8,128)}', space=vmem, size = 0x4000, scoped, tag = 'scratch operand']
  #allocation3 [shape = 's32[1]{0}', space=sflag, size = 0x4, scoped, tag = 'scratch operand']
  #allocation4 [shape = 's32[1]{0}', space=sflag, size = 0x4, scoped, tag = 'scoped memory for tpu_custom_call.1']
  #allocation5 [shape = 'u8[512]{0}', space=smem, size = 0x200, scoped, tag = 'prefetched SMEM operand 0']
  #allocation8 [shape = 's32[]', space=sflag, size = 0x4, offset = 0, fixed_abs, tag = 'sflag constant byte address 0x0 - dummy sync flag']
  #allocation9 [shape = 's32[]', space=sflag, size = 0x4, offset = 0, fixed_abs, tag = 'sflag constant byte address 0x0 - dummy sync flag']
  #allocation10 [shape = 'u32[]', space=smem, size = 0x4, offset = 0x44, fixed_abs, tag = 'smem constant byte address 0x44 - assertion arg 0']
  #allocation11 [shape = 'u32[]', space=smem, size = 0x4, offset = 0x48, fixed_abs, tag = 'smem constant byte address 0x48 - assertion arg 1']
  #allocation12 [shape = 's32[]', space=sflag, size = 0x4, offset = 0, fixed_abs, tag = 'sflag constant byte address 0x0 - dummy sync flag']
  #allocation13 [shape = 's32[]', space=sflag, size = 0x4, offset = 0, fixed_abs, tag = 'sflag constant byte address 0x0 - dummy sync flag']
  #allocation14 [shape = 's32[]', space=sflag, size = 0x4, offset = 0, fixed_abs, tag = 'sflag constant byte address 0x0 - dummy sync flag']
  #allocation15 [shape = 's32[]', space=sflag, size = 0x4, offset = 0, fixed_abs, tag = 'sflag constant byte address 0x0 - dummy sync flag']
  #allocation16 [shape = 's32[]', space=sflag, size = 0x4, offset = 0, fixed_abs, tag = 'sflag constant byte address 0x0 - dummy sync flag']
  #allocation17 [shape = 's32[]', space=sflag, size = 0x4, offset = 0, fixed_abs, tag = 'sflag constant byte address 0x0 - dummy sync flag']
  #allocation18 [shape = 's32[]', space=sflag, size = 0x4, offset = 0, fixed_abs, tag = 'sflag constant byte address 0x0 - dummy sync flag']
  #allocation19 [shape = 's32[]', space=sflag, size = 0x4, offset = 0, fixed_abs, tag = 'sflag constant byte address 0x0 - dummy sync flag']
  #allocation20 [shape = 's32[]', space=sflag, size = 0x4, offset = 0, fixed_abs, tag = 'sflag constant byte address 0x0 - dummy sync flag']
  #allocation21 [shape = 's32[]', space=sflag, size = 0x4, offset = 0, fixed_abs, tag = 'sflag constant byte address 0x0 - dummy sync flag']
  #allocation22 [shape = 's32[]', space=sflag, size = 0x4, offset = 0, fixed_abs, tag = 'sflag constant byte address 0x0 - dummy sync flag']
  #allocation23 [shape = 's32[]', space=sflag, size = 0x4, offset = 0, fixed_abs, tag = 'sflag constant byte address 0x0 - dummy sync flag']
  #allocation24 [shape = 's32[]', space=sflag, size = 0x4, offset = 0, fixed_abs, tag = 'sflag constant byte address 0x0 - dummy sync flag']
  #allocation25 [shape = 's32[]', space=sflag, size = 0x4, offset = 0, fixed_abs, tag = 'sflag constant byte address 0x0 - dummy sync flag']
  #allocation26 [shape = 's32[]', space=sflag, size = 0x4, offset = 0, fixed_abs, tag = 'sflag constant byte address 0x0 - dummy sync flag']
  #allocation27 [shape = 's32[]', space=sflag, size = 0x4, offset = 0, fixed_abs, tag = 'sflag constant byte address 0x0 - dummy sync flag']
  #allocation28 [shape = 's32[]', space=sflag, size = 0x4, offset = 0, fixed_abs, tag = 'sflag constant byte address 0x0 - dummy sync flag']
  #allocation29 [shape = 's32[]', space=sflag, size = 0x4, offset = 0, fixed_abs, tag = 'sflag constant byte address 0x0 - dummy sync flag']
  #allocation30 [shape = 's32[]', space=sflag, size = 0x4, offset = 0, fixed_abs, tag = 'sflag constant byte address 0x0 - dummy sync flag']
  #allocation31 [shape = 's32[]', space=sflag, size = 0x4, offset = 0, fixed_abs, tag = 'sflag constant byte address 0x0 - dummy sync flag']
  #allocation32 [shape = 's32[]', space=sflag, size = 0x4, offset = 0, fixed_abs, tag = 'sflag constant byte address 0x0 - dummy sync flag']
  #allocation33 [shape = 's32[]', space=sflag, size = 0x4, offset = 0, fixed_abs, tag = 'sflag constant byte address 0x0 - dummy sync flag']
  #allocation34 [shape = 's32[]', space=sflag, size = 0x4, offset = 0, fixed_abs, tag = 'sflag constant byte address 0x0 - dummy sync flag']
  #allocation35 [shape = 's32[]', space=sflag, size = 0x4, offset = 0, fixed_abs, tag = 'sflag constant byte address 0x0 - dummy sync flag']
  #allocation36 [shape = 's32[]', space=sflag, size = 0x4, offset = 0, fixed_abs, tag = 'sflag constant byte address 0x0 - dummy sync flag']
  #allocation37 [shape = 's32[]', space=sflag, size = 0x4, offset = 0, fixed_abs, tag = 'sflag constant byte address 0x0 - dummy sync flag']
  #allocation38 [shape = 's32[]', space=sflag, size = 0x4, offset = 0, fixed_abs, tag = 'sflag constant byte address 0x0 - dummy sync flag']
  #allocation39 [shape = 's32[]', space=sflag, size = 0x4, offset = 0, fixed_abs, tag = 'sflag constant byte address 0x0 - dummy sync flag']
  #allocation40 [shape = 's32[]', space=sflag, size = 0x4, offset = 0, fixed_abs, tag = 'sflag constant byte address 0x0 - dummy sync flag']
  #allocation41 [shape = 's32[]', space=sflag, size = 0x4, offset = 0, fixed_abs, tag = 'sflag constant byte address 0x0 - dummy sync flag']
  #allocation42 [shape = 's32[]', space=sflag, size = 0x4, offset = 0, fixed_abs, tag = 'sflag constant byte address 0x0 - dummy sync flag']
  #allocation43 [shape = 's32[]', space=sflag, size = 0x4, offset = 0, fixed_abs, tag = 'sflag constant byte address 0x0 - dummy sync flag']
  #allocation44 [shape = 's32[]', space=sflag, size = 0x4, offset = 0, fixed_abs, tag = 'sflag constant byte address 0x0 - dummy sync flag']
  #allocation45 [shape = 's32[]', space=sflag, size = 0x4, offset = 0, fixed_abs, tag = 'sflag constant byte address 0x0 - dummy sync flag']
  #allocation46 [shape = 's32[]', space=sflag, size = 0x4, offset = 0, fixed_abs, tag = 'sflag constant byte address 0x0 - dummy sync flag']
  #allocation47 [shape = 's32[]', space=sflag, size = 0x4, offset = 0, fixed_abs, tag = 'sflag constant byte address 0x0 - dummy sync flag']
  #allocation48 [shape = 's32[]', space=sflag, size = 0x4, offset = 0, fixed_abs, tag = 'sflag constant byte address 0x0 - dummy sync flag']
  #allocation49 [shape = 's32[]', space=sflag, size = 0x4, offset = 0, fixed_abs, tag = 'sflag constant byte address 0x0 - dummy sync flag']
  #allocation50 [shape = 's32[]', space=sflag, size = 0x4, offset = 0, fixed_abs, tag = 'sflag constant byte address 0x0 - dummy sync flag']
  #allocation51 [shape = 's32[]', space=sflag, size = 0x4, offset = 0, fixed_abs, tag = 'sflag constant byte address 0x0 - dummy sync flag']
  #allocation52 [shape = 's32[]', space=sflag, size = 0x4, offset = 0, fixed_abs, tag = 'sflag constant byte address 0x0 - dummy sync flag']
  #allocation53 [shape = 's32[]', space=sflag, size = 0x4, offset = 0, fixed_abs, tag = 'sflag constant byte address 0x0 - dummy sync flag']
  #allocation54 [shape = 's32[]', space=sflag, size = 0x4, offset = 0, fixed_abs, tag = 'sflag constant byte address 0x0 - dummy sync flag']
  #allocation55 [shape = 's32[]', space=sflag, size = 0x4, offset = 0, fixed_abs, tag = 'sflag constant byte address 0x0 - dummy sync flag']
  #allocation56 [shape = 's32[]', space=sflag, size = 0x4, offset = 0, fixed_abs, tag = 'sflag constant byte address 0x0 - dummy sync flag']
  #allocation57 [shape = 's32[]', space=sflag, size = 0x4, offset = 0, fixed_abs, tag = 'sflag constant byte address 0x0 - dummy sync flag']
  #allocation58 [shape = 's32[]', space=sflag, size = 0x4, offset = 0, fixed_abs, tag = 'sflag constant byte address 0x0 - dummy sync flag']
  #allocation59 [shape = 's32[]', space=sflag, size = 0x4, offset = 0, fixed_abs, tag = 'sflag constant byte address 0x0 - dummy sync flag']
  #allocation60 [shape = 's32[]', space=sflag, size = 0x4, offset = 0, fixed_abs, tag = 'sflag constant byte address 0x0 - dummy sync flag']
  #allocation61 [shape = 's32[]', space=sflag, size = 0x4, offset = 0, fixed_abs, tag = 'sflag constant byte address 0x0 - dummy sync flag']
  #allocation62 [shape = 's32[]', space=sflag, size = 0x4, offset = 0, fixed_abs, tag = 'sflag constant byte address 0x0 - dummy sync flag']
  #allocation63 [shape = 's32[]', space=sflag, size = 0x4, offset = 0, fixed_abs, tag = 'sflag constant byte address 0x0 - dummy sync flag']
  #allocation64 [shape = 's32[]', space=sflag, size = 0x4, offset = 0, fixed_abs, tag = 'sflag constant byte address 0x0 - dummy sync flag']
  #allocation65 [shape = 's32[]', space=sflag, size = 0x4, offset = 0, fixed_abs, tag = 'sflag constant byte address 0x0 - dummy sync flag']
  #allocation66 [shape = 's32[]', space=sflag, size = 0x4, offset = 0, fixed_abs, tag = 'sflag constant byte address 0x0 - dummy sync flag']
  #allocation67 [shape = 's32[]', space=sflag, size = 0x4, offset = 0, fixed_abs, tag = 'sflag constant byte address 0x0 - dummy sync flag']
  #allocation68 [shape = 's32[]', space=sflag, size = 0x4, offset = 0, fixed_abs, tag = 'sflag constant byte address 0x0 - dummy sync flag']
  #allocation69 [shape = 's32[]', space=sflag, size = 0x4, offset = 0, fixed_abs, tag = 'sflag constant byte address 0x0 - dummy sync flag']
  #allocation70 [shape = 's32[]', space=sflag, size = 0x4, offset = 0, fixed_abs, tag = 'sflag constant byte address 0x0 - dummy sync flag']
  #allocation71 [shape = 's32[]', space=sflag, size = 0x4, offset = 0, fixed_abs, tag = 'sflag constant byte address 0x0 - dummy sync flag']
  #allocation72 [shape = 's32[]', space=sflag, size = 0x4, offset = 0, fixed_abs, tag = 'sflag constant byte address 0x0 - dummy sync flag']
  #allocation73 [shape = 's32[]', space=sflag, size = 0x4, offset = 0, fixed_abs, tag = 'sflag constant byte address 0x0 - dummy sync flag']
  %s0 = inlined_call_operand.hbm [shape: s32[128], index: 0, kind: input, shape index: {}]
  %s1 = inlined_call_operand.hbm [shape: f32[64,128], index: 1, kind: input, shape index: {}]
  %s2 = inlined_call_operand.hbm [shape: f32[128,128], index: 2, kind: output, shape index: {}]
  %s3 = sld [smem:[#allocation0]]
  $region153: #{tpu_custom_call.1} parent=0
    _
  %s5 = ssub.s32 1, %s3
  %s6 = scalar_select 0, %s5, %s3
  %8 = dma.hbm_to_smem %s0, 16, [#allocation5], [#allocation4]
  %9 = dma.done [#allocation4], 16
  %10 = sfence
  $region1: #{tpu_custom_call.1} parent=0
    #allocation6 [shape = 'u8[32768]{0}', space=vmem, size = 0x8000, scoped, tag = 'output window, operand 0']
    #allocation7 [shape = 's32[2]{0}', space=sflag, size = 0x8, scoped, tag = 'scoped memory for tpu_custom_call.1']
    %11 = vsyncpa [#allocation7], 0
    %s12 = scalar_lea.sflag [#allocation7], 1
    %13 = vsyncpa %s12, 0
    loop: start=0, step=1, limit=5
    $region2: #{tpu_custom_call.1} parent=1 // loop_pre_header
      _
    $region3: #{tpu_custom_call.1} parent=1 // loop_header
      %s15 = sphi 0, %s19
      %p16 = scmp.ge.s32.totalorder %s15, 5
      %s24 = sphi 0, %s26
      %s27 = sphi 0, %s24
      %s37 = sphi 0, %s27
    $region4: #{tpu_custom_call.1} parent=1 // loop_header_branch
      %18 = sbr.rel (%p16) target = $region8
    $region5: #{tpu_custom_call.1} parent=1 // loop_body
      %s20 = ssub.s32 %s15, 1
      %s21 = sadd.s32 %s15, 1
      %s22 = ssub.s32 %s15, %s21
      %p23 = scmp.eq.s32.totalorder %s22, 0
      %s25 = sadd.s32 %s24, 1
      %s26 = scalar_select %p23, %s24, %s25
      %p28 = pneg %p23
      %p29 = scmp.eq.s32.totalorder %s15, 3
      %p30 = por %p28, %p29
      %p31 = scmp.ne.s32.totalorder %s24, %s27
      %p32 = scmp.eq.s32.totalorder %s15, 0
      %p33 = por %p31, %p32
      %p34 = scmp.ne.s32.totalorder %s24, %s27
      %p35 = scmp.eq.s32.totalorder %s20, 3
      %p36 = por %p34, %p35
      %p38 = scmp.ne.s32.totalorder %s27, %s37
      %p39 = scmp.eq.s32.totalorder %s20, 0
      %p40 = por %p38, %p39
      %p41 = scmp.lt.s32.totalorder %s15, 4
      // Predicated region
      $region9: #{tpu_custom_call.1} parent=5 // pred_check
        %p42 = pneg %p41
      $region10: #{tpu_custom_call.1} parent=5 // pred_check_branch
        %44 = sbr.rel (%p42) target = $region12
      $region11: #{tpu_custom_call.1} parent=5 // pred_region
        %p45 = pneg %p33
        %p46 = pneg %p30
        %s47 = sand.u32 %s24, 1
        %s48 = scalar_lea.sflag [#allocation7], %s47
        %s49 = sand.u32 %s24, 1
        %s50 = smul.addr %s49, 32
        %s51 = scalar_lea.vmem [#allocation6], %s50
        %s52 = smul.u32 4, %s15
        %s53 = smul.u32 %s15, 32
        %s54 = sld [smem:[#allocation5 + %s53]]
        %s55 = smul.addr %s54, 16
        %s56 = scalar_lea.hbm %s1, %s55
        // Predicated region
        $region13: #{tpu_custom_call.1} parent=11 // pred_check
          _
        $region14: #{tpu_custom_call.1} parent=11 // pred_check_branch
          %58 = sbr.rel target = $region16
        $region15: #{tpu_custom_call.1} parent=11 // pred_region
          %59 = sst [smem:[#allocation10]] [#allocation9]
          %60 = sst [smem:[#allocation11]] [#allocation8]
        $region16: #{tpu_custom_call.1} parent=11 // pred_fallthru
          _
        %62 = shalt.err (0)
        %s64 = sshll.u32 [#allocation2], 4
        %s65 = int_to_ptr.vmem [resolvable:$true] %s64
        %67 = dma.hbm_to_vmem [thread:$0]  %s56, 16, %s65, [#allocation3]
        %s68 = sadd.s32 %s53, 1
        %s69 = sld [smem:[#allocation5 + %s68]]
        %s70 = smul.addr %s69, 16
        %s71 = scalar_lea.hbm %s1, %s70
        %s72 = scalar_lea.vmem [#allocation2], 1
        // Predicated region
        $region17: #{tpu_custom_call.1} parent=11 // pred_check
          _
        $region18: #{tpu_custom_call.1} parent=11 // pred_check_branch
          %74 = sbr.rel target = $region20
        $region19: #{tpu_custom_call.1} parent=11 // pred_region
          %75 = sst [smem:[#allocation10]] [#allocation13]
          %76 = sst [smem:[#allocation11]] [#allocation12]
        $region20: #{tpu_custom_call.1} parent=11 // pred_fallthru
          _
        %78 = shalt.err (0)
        %s80 = sshll.u32 %s72, 4
        %s81 = int_to_ptr.vmem [resolvable:$true] %s80
        %83 = dma.hbm_to_vmem [thread:$0]  %s71, 16, %s81, [#allocation3]
        %s84 = sadd.s32 %s53, 2
        %s85 = sld [smem:[#allocation5 + %s84]]
        %s86 = smul.addr %s85, 16
        %s87 = scalar_lea.hbm %s1, %s86
        %s88 = scalar_lea.vmem [#allocation2], 2
        // Predicated region
        $region21: #{tpu_custom_call.1} parent=11 // pred_check
          _
        $region22: #{tpu_custom_call.1} parent=11 // pred_check_branch
          %90 = sbr.rel target = $region24
        $region23: #{tpu_custom_call.1} parent=11 // pred_region
          %91 = sst [smem:[#allocation10]] [#allocation15]
          %92 = sst [smem:[#allocation11]] [#allocation14]
        $region24: #{tpu_custom_call.1} parent=11 // pred_fallthru
          _
        %94 = shalt.err (0)
        %s96 = sshll.u32 %s88, 4
        %s97 = int_to_ptr.vmem [resolvable:$true] %s96
        %99 = dma.hbm_to_vmem [thread:$0]  %s87, 16, %s97, [#allocation3]
        %s100 = sadd.s32 %s53, 3
        %s101 = sld [smem:[#allocation5 + %s100]]
        %s102 = smul.addr %s101, 16
        %s103 = scalar_lea.hbm %s1, %s102
        %s104 = scalar_lea.vmem [#allocation2], 3
        // Predicated region
        $region25: #{tpu_custom_call.1} parent=11 // pred_check
          _
        $region26: #{tpu_custom_call.1} parent=11 // pred_check_branch
          %106 = sbr.rel target = $region28
        $region27: #{tpu_custom_call.1} parent=11 // pred_region
          %107 = sst [smem:[#allocation10]] [#allocation17]
          %108 = sst [smem:[#allocation11]] [#allocation16]
        $region28: #{tpu_custom_call.1} parent=11 // pred_fallthru
          _
        %110 = shalt.err (0)
        %s112 = sshll.u32 %s104, 4
        %s113 = int_to_ptr.vmem [resolvable:$true] %s112
        %115 = dma.hbm_to_vmem [thread:$0]  %s103, 16, %s113, [#allocation3]
        %s116 = sadd.s32 %s53, 4
        %s117 = sld [smem:[#allocation5 + %s116]]
        %s118 = smul.addr %s117, 16
        %s119 = scalar_lea.hbm %s1, %s118
        %s120 = scalar_lea.vmem [#allocation2], 4
        // Predicated region
        $region29: #{tpu_custom_call.1} parent=11 // pred_check
          _
        $region30: #{tpu_custom_call.1} parent=11 // pred_check_branch
          %122 = sbr.rel target = $region32
        $region31: #{tpu_custom_call.1} parent=11 // pred_region
          %123 = sst [smem:[#allocation10]] [#allocation19]
          %124 = sst [smem:[#allocation11]] [#allocation18]
        $region32: #{tpu_custom_call.1} parent=11 // pred_fallthru
          _
        %126 = shalt.err (0)
        %s128 = sshll.u32 %s120, 4
        %s129 = int_to_ptr.vmem [resolvable:$true] %s128
        %131 = dma.hbm_to_vmem [thread:$0]  %s119, 16, %s129, [#allocation3]
        %s132 = sadd.s32 %s53, 5
        %s133 = sld [smem:[#allocation5 + %s132]]
        %s134 = smul.addr %s133, 16
        %s135 = scalar_lea.hbm %s1, %s134
        %s136 = scalar_lea.vmem [#allocation2], 5
        // Predicated region
        $region33: #{tpu_custom_call.1} parent=11 // pred_check
          _
        $region34: #{tpu_custom_call.1} parent=11 // pred_check_branch
          %138 = sbr.rel target = $region36
        $region35: #{tpu_custom_call.1} parent=11 // pred_region
          %139 = sst [smem:[#allocation10]] [#allocation21]
          %140 = sst [smem:[#allocation11]] [#allocation20]
        $region36: #{tpu_custom_call.1} parent=11 // pred_fallthru
          _
        %142 = shalt.err (0)
        %s144 = sshll.u32 %s136, 4
        %s145 = int_to_ptr.vmem [resolvable:$true] %s144
        %147 = dma.hbm_to_vmem [thread:$0]  %s135, 16, %s145, [#allocation3]
        %s148 = sadd.s32 %s53, 6
        %s149 = sld [smem:[#allocation5 + %s148]]
        %s150 = smul.addr %s149, 16
        %s151 = scalar_lea.hbm %s1, %s150
        %s152 = scalar_lea.vmem [#allocation2], 6
        // Predicated region
        $region37: #{tpu_custom_call.1} parent=11 // pred_check
          _
        $region38: #{tpu_custom_call.1} parent=11 // pred_check_branch
          %154 = sbr.rel target = $region40
        $region39: #{tpu_custom_call.1} parent=11 // pred_region
          %155 = sst [smem:[#allocation10]] [#allocation23]
          %156 = sst [smem:[#allocation11]] [#allocation22]
        $region40: #{tpu_custom_call.1} parent=11 // pred_fallthru
          _
        %158 = shalt.err (0)
        %s160 = sshll.u32 %s152, 4
        %s161 = int_to_ptr.vmem [resolvable:$true] %s160
        %163 = dma.hbm_to_vmem [thread:$0]  %s151, 16, %s161, [#allocation3]
        %s164 = sadd.s32 %s53, 7
        %s165 = sld [smem:[#allocation5 + %s164]]
        %s166 = smul.addr %s165, 16
        %s167 = scalar_lea.hbm %s1, %s166
        %s168 = scalar_lea.vmem [#allocation2], 7
        // Predicated region
        $region41: #{tpu_custom_call.1} parent=11 // pred_check
          _
        $region42: #{tpu_custom_call.1} parent=11 // pred_check_branch
          %170 = sbr.rel target = $region44
        $region43: #{tpu_custom_call.1} parent=11 // pred_region
          %171 = sst [smem:[#allocation10]] [#allocation25]
          %172 = sst [smem:[#allocation11]] [#allocation24]
        $region44: #{tpu_custom_call.1} parent=11 // pred_fallthru
          _
        %174 = shalt.err (0)
        %s176 = sshll.u32 %s168, 4
        %s177 = int_to_ptr.vmem [resolvable:$true] %s176
        %179 = dma.hbm_to_vmem [thread:$0]  %s167, 16, %s177, [#allocation3]
        %s180 = sadd.s32 %s53, 8
        %s181 = sld [smem:[#allocation5 + %s180]]
        %s182 = smul.addr %s181, 16
        %s183 = scalar_lea.hbm %s1, %s182
        %s184 = scalar_lea.vmem [#allocation2], 8
        // Predicated region
        $region45: #{tpu_custom_call.1} parent=11 // pred_check
          _
        $region46: #{tpu_custom_call.1} parent=11 // pred_check_branch
          %186 = sbr.rel target = $region48
        $region47: #{tpu_custom_call.1} parent=11 // pred_region
          %187 = sst [smem:[#allocation10]] [#allocation27]
          %188 = sst [smem:[#allocation11]] [#allocation26]
        $region48: #{tpu_custom_call.1} parent=11 // pred_fallthru
          _
        %190 = shalt.err (0)
        %s192 = sshll.u32 %s184, 4
        %s193 = int_to_ptr.vmem [resolvable:$true] %s192
        %195 = dma.hbm_to_vmem [thread:$0]  %s183, 16, %s193, [#allocation3]
        %s196 = sadd.s32 %s53, 9
        %s197 = sld [smem:[#allocation5 + %s196]]
        %s198 = smul.addr %s197, 16
        %s199 = scalar_lea.hbm %s1, %s198
        %s200 = scalar_lea.vmem [#allocation2], 9
        // Predicated region
        $region49: #{tpu_custom_call.1} parent=11 // pred_check
          _
        $region50: #{tpu_custom_call.1} parent=11 // pred_check_branch
          %202 = sbr.rel target = $region52
        $region51: #{tpu_custom_call.1} parent=11 // pred_region
          %203 = sst [smem:[#allocation10]] [#allocation29]
          %204 = sst [smem:[#allocation11]] [#allocation28]
        $region52: #{tpu_custom_call.1} parent=11 // pred_fallthru
          _
        %206 = shalt.err (0)
        %s208 = sshll.u32 %s200, 4
        %s209 = int_to_ptr.vmem [resolvable:$true] %s208
        %211 = dma.hbm_to_vmem [thread:$0]  %s199, 16, %s209, [#allocation3]
        %s212 = sadd.s32 %s53, 10
        %s213 = sld [smem:[#allocation5 + %s212]]
        %s214 = smul.addr %s213, 16
        %s215 = scalar_lea.hbm %s1, %s214
        %s216 = scalar_lea.vmem [#allocation2], 10
        // Predicated region
        $region53: #{tpu_custom_call.1} parent=11 // pred_check
          _
        $region54: #{tpu_custom_call.1} parent=11 // pred_check_branch
          %218 = sbr.rel target = $region56
        $region55: #{tpu_custom_call.1} parent=11 // pred_region
          %219 = sst [smem:[#allocation10]] [#allocation31]
          %220 = sst [smem:[#allocation11]] [#allocation30]
        $region56: #{tpu_custom_call.1} parent=11 // pred_fallthru
          _
        %222 = shalt.err (0)
        %s224 = sshll.u32 %s216, 4
        %s225 = int_to_ptr.vmem [resolvable:$true] %s224
        %227 = dma.hbm_to_vmem [thread:$0]  %s215, 16, %s225, [#allocation3]
        %s228 = sadd.s32 %s53, 11
        %s229 = sld [smem:[#allocation5 + %s228]]
        %s230 = smul.addr %s229, 16
        %s231 = scalar_lea.hbm %s1, %s230
        %s232 = scalar_lea.vmem [#allocation2], 11
        // Predicated region
        $region57: #{tpu_custom_call.1} parent=11 // pred_check
          _
        $region58: #{tpu_custom_call.1} parent=11 // pred_check_branch
          %234 = sbr.rel target = $region60
        $region59: #{tpu_custom_call.1} parent=11 // pred_region
          %235 = sst [smem:[#allocation10]] [#allocation33]
          %236 = sst [smem:[#allocation11]] [#allocation32]
        $region60: #{tpu_custom_call.1} parent=11 // pred_fallthru
          _
        %238 = shalt.err (0)
        %s240 = sshll.u32 %s232, 4
        %s241 = int_to_ptr.vmem [resolvable:$true] %s240
        %243 = dma.hbm_to_vmem [thread:$0]  %s231, 16, %s241, [#allocation3]
        %s244 = sadd.s32 %s53, 12
        %s245 = sld [smem:[#allocation5 + %s244]]
        %s246 = smul.addr %s245, 16
        %s247 = scalar_lea.hbm %s1, %s246
        %s248 = scalar_lea.vmem [#allocation2], 12
        // Predicated region
        $region61: #{tpu_custom_call.1} parent=11 // pred_check
          _
        $region62: #{tpu_custom_call.1} parent=11 // pred_check_branch
          %250 = sbr.rel target = $region64
        $region63: #{tpu_custom_call.1} parent=11 // pred_region
          %251 = sst [smem:[#allocation10]] [#allocation35]
          %252 = sst [smem:[#allocation11]] [#allocation34]
        $region64: #{tpu_custom_call.1} parent=11 // pred_fallthru
          _
        %254 = shalt.err (0)
        %s256 = sshll.u32 %s248, 4
        %s257 = int_to_ptr.vmem [resolvable:$true] %s256
        %259 = dma.hbm_to_vmem [thread:$0]  %s247, 16, %s257, [#allocation3]
        %s260 = sadd.s32 %s53, 13
        %s261 = sld [smem:[#allocation5 + %s260]]
        %s262 = smul.addr %s261, 16
        %s263 = scalar_lea.hbm %s1, %s262
        %s264 = scalar_lea.vmem [#allocation2], 13
        // Predicated region
        $region65: #{tpu_custom_call.1} parent=11 // pred_check
          _
        $region66: #{tpu_custom_call.1} parent=11 // pred_check_branch
          %266 = sbr.rel target = $region68
        $region67: #{tpu_custom_call.1} parent=11 // pred_region
          %267 = sst [smem:[#allocation10]] [#allocation37]
          %268 = sst [smem:[#allocation11]] [#allocation36]
        $region68: #{tpu_custom_call.1} parent=11 // pred_fallthru
          _
        %270 = shalt.err (0)
        %s272 = sshll.u32 %s264, 4
        %s273 = int_to_ptr.vmem [resolvable:$true] %s272
        %275 = dma.hbm_to_vmem [thread:$0]  %s263, 16, %s273, [#allocation3]
        %s276 = sadd.s32 %s53, 14
        %s277 = sld [smem:[#allocation5 + %s276]]
        %s278 = smul.addr %s277, 16
        %s279 = scalar_lea.hbm %s1, %s278
        %s280 = scalar_lea.vmem [#allocation2], 14
        // Predicated region
        $region69: #{tpu_custom_call.1} parent=11 // pred_check
          _
        $region70: #{tpu_custom_call.1} parent=11 // pred_check_branch
          %282 = sbr.rel target = $region72
        $region71: #{tpu_custom_call.1} parent=11 // pred_region
          %283 = sst [smem:[#allocation10]] [#allocation39]
          %284 = sst [smem:[#allocation11]] [#allocation38]
        $region72: #{tpu_custom_call.1} parent=11 // pred_fallthru
          _
        %286 = shalt.err (0)
        %s288 = sshll.u32 %s280, 4
        %s289 = int_to_ptr.vmem [resolvable:$true] %s288
        %291 = dma.hbm_to_vmem [thread:$0]  %s279, 16, %s289, [#allocation3]
        %s292 = sadd.s32 %s53, 15
        %s293 = sld [smem:[#allocation5 + %s292]]
        %s294 = smul.addr %s293, 16
        %s295 = scalar_lea.hbm %s1, %s294
        %s296 = scalar_lea.vmem [#allocation2], 15
        // Predicated region
        $region73: #{tpu_custom_call.1} parent=11 // pred_check
          _
        $region74: #{tpu_custom_call.1} parent=11 // pred_check_branch
          %298 = sbr.rel target = $region76
        $region75: #{tpu_custom_call.1} parent=11 // pred_region
          %299 = sst [smem:[#allocation10]] [#allocation41]
          %300 = sst [smem:[#allocation11]] [#allocation40]
        $region76: #{tpu_custom_call.1} parent=11 // pred_fallthru
          _
        %302 = shalt.err (0)
        %s304 = sshll.u32 %s296, 4
        %s305 = int_to_ptr.vmem [resolvable:$true] %s304
        %307 = dma.hbm_to_vmem [thread:$0]  %s295, 16, %s305, [#allocation3]
        %s308 = sadd.s32 %s53, 16
        %s309 = sld [smem:[#allocation5 + %s308]]
        %s310 = smul.addr %s309, 16
        %s311 = scalar_lea.hbm %s1, %s310
        %s312 = scalar_lea.vmem [#allocation2], 16
        // Predicated region
        $region77: #{tpu_custom_call.1} parent=11 // pred_check
          _
        $region78: #{tpu_custom_call.1} parent=11 // pred_check_branch
          %314 = sbr.rel target = $region80
        $region79: #{tpu_custom_call.1} parent=11 // pred_region
          %315 = sst [smem:[#allocation10]] [#allocation43]
          %316 = sst [smem:[#allocation11]] [#allocation42]
        $region80: #{tpu_custom_call.1} parent=11 // pred_fallthru
          _
        %318 = shalt.err (0)
        %s320 = sshll.u32 %s312, 4
        %s321 = int_to_ptr.vmem [resolvable:$true] %s320
        %323 = dma.hbm_to_vmem [thread:$0]  %s311, 16, %s321, [#allocation3]
        %s324 = sadd.s32 %s53, 17
        %s325 = sld [smem:[#allocation5 + %s324]]
        %s326 = smul.addr %s325, 16
        %s327 = scalar_lea.hbm %s1, %s326
        %s328 = scalar_lea.vmem [#allocation2], 17
        // Predicated region
        $region81: #{tpu_custom_call.1} parent=11 // pred_check
          _
        $region82: #{tpu_custom_call.1} parent=11 // pred_check_branch
          %330 = sbr.rel target = $region84
        $region83: #{tpu_custom_call.1} parent=11 // pred_region
          %331 = sst [smem:[#allocation10]] [#allocation45]
          %332 = sst [smem:[#allocation11]] [#allocation44]
        $region84: #{tpu_custom_call.1} parent=11 // pred_fallthru
          _
        %334 = shalt.err (0)
        %s336 = sshll.u32 %s328, 4
        %s337 = int_to_ptr.vmem [resolvable:$true] %s336
        %339 = dma.hbm_to_vmem [thread:$0]  %s327, 16, %s337, [#allocation3]
        %s340 = sadd.s32 %s53, 18
        %s341 = sld [smem:[#allocation5 + %s340]]
        %s342 = smul.addr %s341, 16
        %s343 = scalar_lea.hbm %s1, %s342
        %s344 = scalar_lea.vmem [#allocation2], 18
        // Predicated region
        $region85: #{tpu_custom_call.1} parent=11 // pred_check
          _
        $region86: #{tpu_custom_call.1} parent=11 // pred_check_branch
          %346 = sbr.rel target = $region88
        $region87: #{tpu_custom_call.1} parent=11 // pred_region
          %347 = sst [smem:[#allocation10]] [#allocation47]
          %348 = sst [smem:[#allocation11]] [#allocation46]
        $region88: #{tpu_custom_call.1} parent=11 // pred_fallthru
          _
        %350 = shalt.err (0)
        %s352 = sshll.u32 %s344, 4
        %s353 = int_to_ptr.vmem [resolvable:$true] %s352
        %355 = dma.hbm_to_vmem [thread:$0]  %s343, 16, %s353, [#allocation3]
        %s356 = sadd.s32 %s53, 19
        %s357 = sld [smem:[#allocation5 + %s356]]
        %s358 = smul.addr %s357, 16
        %s359 = scalar_lea.hbm %s1, %s358
        %s360 = scalar_lea.vmem [#allocation2], 19
        // Predicated region
        $region89: #{tpu_custom_call.1} parent=11 // pred_check
          _
        $region90: #{tpu_custom_call.1} parent=11 // pred_check_branch
          %362 = sbr.rel target = $region92
        $region91: #{tpu_custom_call.1} parent=11 // pred_region
          %363 = sst [smem:[#allocation10]] [#allocation49]
          %364 = sst [smem:[#allocation11]] [#allocation48]
        $region92: #{tpu_custom_call.1} parent=11 // pred_fallthru
          _
        %366 = shalt.err (0)
        %s368 = sshll.u32 %s360, 4
        %s369 = int_to_ptr.vmem [resolvable:$true] %s368
        %371 = dma.hbm_to_vmem [thread:$0]  %s359, 16, %s369, [#allocation3]
        %s372 = sadd.s32 %s53, 20
        %s373 = sld [smem:[#allocation5 + %s372]]
        %s374 = smul.addr %s373, 16
        %s375 = scalar_lea.hbm %s1, %s374
        %s376 = scalar_lea.vmem [#allocation2], 20
        // Predicated region
        $region93: #{tpu_custom_call.1} parent=11 // pred_check
          _
        $region94: #{tpu_custom_call.1} parent=11 // pred_check_branch
          %378 = sbr.rel target = $region96
        $region95: #{tpu_custom_call.1} parent=11 // pred_region
          %379 = sst [smem:[#allocation10]] [#allocation51]
          %380 = sst [smem:[#allocation11]] [#allocation50]
        $region96: #{tpu_custom_call.1} parent=11 // pred_fallthru
          _
        %382 = shalt.err (0)
        %s384 = sshll.u32 %s376, 4
        %s385 = int_to_ptr.vmem [resolvable:$true] %s384
        %387 = dma.hbm_to_vmem [thread:$0]  %s375, 16, %s385, [#allocation3]
        %s388 = sadd.s32 %s53, 21
        %s389 = sld [smem:[#allocation5 + %s388]]
        %s390 = smul.addr %s389, 16
        %s391 = scalar_lea.hbm %s1, %s390
        %s392 = scalar_lea.vmem [#allocation2], 21
        // Predicated region
        $region97: #{tpu_custom_call.1} parent=11 // pred_check
          _
        $region98: #{tpu_custom_call.1} parent=11 // pred_check_branch
          %394 = sbr.rel target = $region100
        $region99: #{tpu_custom_call.1} parent=11 // pred_region
          %395 = sst [smem:[#allocation10]] [#allocation53]
          %396 = sst [smem:[#allocation11]] [#allocation52]
        $region100: #{tpu_custom_call.1} parent=11 // pred_fallthru
          _
        %398 = shalt.err (0)
        %s400 = sshll.u32 %s392, 4
        %s401 = int_to_ptr.vmem [resolvable:$true] %s400
        %403 = dma.hbm_to_vmem [thread:$0]  %s391, 16, %s401, [#allocation3]
        %s404 = sadd.s32 %s53, 22
        %s405 = sld [smem:[#allocation5 + %s404]]
        %s406 = smul.addr %s405, 16
        %s407 = scalar_lea.hbm %s1, %s406
        %s408 = scalar_lea.vmem [#allocation2], 22
        // Predicated region
        $region101: #{tpu_custom_call.1} parent=11 // pred_check
          _
        $region102: #{tpu_custom_call.1} parent=11 // pred_check_branch
          %410 = sbr.rel target = $region104
        $region103: #{tpu_custom_call.1} parent=11 // pred_region
          %411 = sst [smem:[#allocation10]] [#allocation55]
          %412 = sst [smem:[#allocation11]] [#allocation54]
        $region104: #{tpu_custom_call.1} parent=11 // pred_fallthru
          _
        %414 = shalt.err (0)
        %s416 = sshll.u32 %s408, 4
        %s417 = int_to_ptr.vmem [resolvable:$true] %s416
        %419 = dma.hbm_to_vmem [thread:$0]  %s407, 16, %s417, [#allocation3]
        %s420 = sadd.s32 %s53, 23
        %s421 = sld [smem:[#allocation5 + %s420]]
        %s422 = smul.addr %s421, 16
        %s423 = scalar_lea.hbm %s1, %s422
        %s424 = scalar_lea.vmem [#allocation2], 23
        // Predicated region
        $region105: #{tpu_custom_call.1} parent=11 // pred_check
          _
        $region106: #{tpu_custom_call.1} parent=11 // pred_check_branch
          %426 = sbr.rel target = $region108
        $region107: #{tpu_custom_call.1} parent=11 // pred_region
          %427 = sst [smem:[#allocation10]] [#allocation57]
          %428 = sst [smem:[#allocation11]] [#allocation56]
        $region108: #{tpu_custom_call.1} parent=11 // pred_fallthru
          _
        %430 = shalt.err (0)
        %s432 = sshll.u32 %s424, 4
        %s433 = int_to_ptr.vmem [resolvable:$true] %s432
        %435 = dma.hbm_to_vmem [thread:$0]  %s423, 16, %s433, [#allocation3]
        %s436 = sadd.s32 %s53, 24
        %s437 = sld [smem:[#allocation5 + %s436]]
        %s438 = smul.addr %s437, 16
        %s439 = scalar_lea.hbm %s1, %s438
        %s440 = scalar_lea.vmem [#allocation2], 24
        // Predicated region
        $region109: #{tpu_custom_call.1} parent=11 // pred_check
          _
        $region110: #{tpu_custom_call.1} parent=11 // pred_check_branch
          %442 = sbr.rel target = $region112
        $region111: #{tpu_custom_call.1} parent=11 // pred_region
          %443 = sst [smem:[#allocation10]] [#allocation59]
          %444 = sst [smem:[#allocation11]] [#allocation58]
        $region112: #{tpu_custom_call.1} parent=11 // pred_fallthru
          _
        %446 = shalt.err (0)
        %s448 = sshll.u32 %s440, 4
        %s449 = int_to_ptr.vmem [resolvable:$true] %s448
        %451 = dma.hbm_to_vmem [thread:$0]  %s439, 16, %s449, [#allocation3]
        %s452 = sadd.s32 %s53, 25
        %s453 = sld [smem:[#allocation5 + %s452]]
        %s454 = smul.addr %s453, 16
        %s455 = scalar_lea.hbm %s1, %s454
        %s456 = scalar_lea.vmem [#allocation2], 25
        // Predicated region
        $region113: #{tpu_custom_call.1} parent=11 // pred_check
          _
        $region114: #{tpu_custom_call.1} parent=11 // pred_check_branch
          %458 = sbr.rel target = $region116
        $region115: #{tpu_custom_call.1} parent=11 // pred_region
          %459 = sst [smem:[#allocation10]] [#allocation61]
          %460 = sst [smem:[#allocation11]] [#allocation60]
        $region116: #{tpu_custom_call.1} parent=11 // pred_fallthru
          _
        %462 = shalt.err (0)
        %s464 = sshll.u32 %s456, 4
        %s465 = int_to_ptr.vmem [resolvable:$true] %s464
        %467 = dma.hbm_to_vmem [thread:$0]  %s455, 16, %s465, [#allocation3]
        %s468 = sadd.s32 %s53, 26
        %s469 = sld [smem:[#allocation5 + %s468]]
        %s470 = smul.addr %s469, 16
        %s471 = scalar_lea.hbm %s1, %s470
        %s472 = scalar_lea.vmem [#allocation2], 26
        // Predicated region
        $region117: #{tpu_custom_call.1} parent=11 // pred_check
          _
        $region118: #{tpu_custom_call.1} parent=11 // pred_check_branch
          %474 = sbr.rel target = $region120
        $region119: #{tpu_custom_call.1} parent=11 // pred_region
          %475 = sst [smem:[#allocation10]] [#allocation63]
          %476 = sst [smem:[#allocation11]] [#allocation62]
        $region120: #{tpu_custom_call.1} parent=11 // pred_fallthru
          _
        %478 = shalt.err (0)
        %s480 = sshll.u32 %s472, 4
        %s481 = int_to_ptr.vmem [resolvable:$true] %s480
        %483 = dma.hbm_to_vmem [thread:$0]  %s471, 16, %s481, [#allocation3]
        %s484 = sadd.s32 %s53, 27
        %s485 = sld [smem:[#allocation5 + %s484]]
        %s486 = smul.addr %s485, 16
        %s487 = scalar_lea.hbm %s1, %s486
        %s488 = scalar_lea.vmem [#allocation2], 27
        // Predicated region
        $region121: #{tpu_custom_call.1} parent=11 // pred_check
          _
        $region122: #{tpu_custom_call.1} parent=11 // pred_check_branch
          %490 = sbr.rel target = $region124
        $region123: #{tpu_custom_call.1} parent=11 // pred_region
          %491 = sst [smem:[#allocation10]] [#allocation65]
          %492 = sst [smem:[#allocation11]] [#allocation64]
        $region124: #{tpu_custom_call.1} parent=11 // pred_fallthru
          _
        %494 = shalt.err (0)
        %s496 = sshll.u32 %s488, 4
        %s497 = int_to_ptr.vmem [resolvable:$true] %s496
        %499 = dma.hbm_to_vmem [thread:$0]  %s487, 16, %s497, [#allocation3]
        %s500 = sadd.s32 %s53, 28
        %s501 = sld [smem:[#allocation5 + %s500]]
        %s502 = smul.addr %s501, 16
        %s503 = scalar_lea.hbm %s1, %s502
        %s504 = scalar_lea.vmem [#allocation2], 28
        // Predicated region
        $region125: #{tpu_custom_call.1} parent=11 // pred_check
          _
        $region126: #{tpu_custom_call.1} parent=11 // pred_check_branch
          %506 = sbr.rel target = $region128
        $region127: #{tpu_custom_call.1} parent=11 // pred_region
          %507 = sst [smem:[#allocation10]] [#allocation67]
          %508 = sst [smem:[#allocation11]] [#allocation66]
        $region128: #{tpu_custom_call.1} parent=11 // pred_fallthru
          _
        %510 = shalt.err (0)
        %s512 = sshll.u32 %s504, 4
        %s513 = int_to_ptr.vmem [resolvable:$true] %s512
        %515 = dma.hbm_to_vmem [thread:$0]  %s503, 16, %s513, [#allocation3]
        %s516 = sadd.s32 %s53, 29
        %s517 = sld [smem:[#allocation5 + %s516]]
        %s518 = smul.addr %s517, 16
        %s519 = scalar_lea.hbm %s1, %s518
        %s520 = scalar_lea.vmem [#allocation2], 29
        // Predicated region
        $region129: #{tpu_custom_call.1} parent=11 // pred_check
          _
        $region130: #{tpu_custom_call.1} parent=11 // pred_check_branch
          %522 = sbr.rel target = $region132
        $region131: #{tpu_custom_call.1} parent=11 // pred_region
          %523 = sst [smem:[#allocation10]] [#allocation69]
          %524 = sst [smem:[#allocation11]] [#allocation68]
        $region132: #{tpu_custom_call.1} parent=11 // pred_fallthru
          _
        %526 = shalt.err (0)
        %s528 = sshll.u32 %s520, 4
        %s529 = int_to_ptr.vmem [resolvable:$true] %s528
        %531 = dma.hbm_to_vmem [thread:$0]  %s519, 16, %s529, [#allocation3]
        %s532 = sadd.s32 %s53, 30
        %s533 = sld [smem:[#allocation5 + %s532]]
        %s534 = smul.addr %s533, 16
        %s535 = scalar_lea.hbm %s1, %s534
        %s536 = scalar_lea.vmem [#allocation2], 30
        // Predicated region
        $region133: #{tpu_custom_call.1} parent=11 // pred_check
          _
        $region134: #{tpu_custom_call.1} parent=11 // pred_check_branch
          %538 = sbr.rel target = $region136
        $region135: #{tpu_custom_call.1} parent=11 // pred_region
          %539 = sst [smem:[#allocation10]] [#allocation71]
          %540 = sst [smem:[#allocation11]] [#allocation70]
        $region136: #{tpu_custom_call.1} parent=11 // pred_fallthru
          _
        %542 = shalt.err (0)
        %s544 = sshll.u32 %s536, 4
        %s545 = int_to_ptr.vmem [resolvable:$true] %s544
        %547 = dma.hbm_to_vmem [thread:$0]  %s535, 16, %s545, [#allocation3]
        %s548 = sadd.s32 %s53, 31
        %s549 = sld [smem:[#allocation5 + %s548]]
        %s550 = smul.addr %s549, 16
        %s551 = scalar_lea.hbm %s1, %s550
        %s552 = scalar_lea.vmem [#allocation2], 31
        // Predicated region
        $region137: #{tpu_custom_call.1} parent=11 // pred_check
          _
        $region138: #{tpu_custom_call.1} parent=11 // pred_check_branch
          %554 = sbr.rel target = $region140
        $region139: #{tpu_custom_call.1} parent=11 // pred_region
          %555 = sst [smem:[#allocation10]] [#allocation73]
          %556 = sst [smem:[#allocation11]] [#allocation72]
        $region140: #{tpu_custom_call.1} parent=11 // pred_fallthru
          _
        %558 = shalt.err (0)
        %s560 = sshll.u32 %s552, 4
        %s561 = int_to_ptr.vmem [resolvable:$true] %s560
        %563 = dma.hbm_to_vmem [thread:$0]  %s551, 16, %s561, [#allocation3]
        %s564 = smul.u32 1, 1
        %s565 = sshll.u32 %s564, 4
        %566 = dma.done [#allocation3], %s565
        %s567 = sshll.u32 %s564, 4
        %568 = dma.done [#allocation3], %s567
        %s569 = sshll.u32 %s564, 4
        %570 = dma.done [#allocation3], %s569
        %s571 = sshll.u32 %s564, 4
        %572 = dma.done [#allocation3], %s571
        %s573 = sshll.u32 %s564, 4
        %574 = dma.done [#allocation3], %s573
        %s575 = sshll.u32 %s564, 4
        %576 = dma.done [#allocation3], %s575
        %s577 = sshll.u32 %s564, 4
        %578 = dma.done [#allocation3], %s577
        %s579 = sshll.u32 %s564, 4
        %580 = dma.done [#allocation3], %s579
        %s581 = sshll.u32 %s564, 4
        %582 = dma.done [#allocation3], %s581
        %s583 = sshll.u32 %s564, 4
        %584 = dma.done [#allocation3], %s583
        %s585 = sshll.u32 %s564, 4
        %586 = dma.done [#allocation3], %s585
        %s587 = sshll.u32 %s564, 4
        %588 = dma.done [#allocation3], %s587
        %s589 = sshll.u32 %s564, 4
        %590 = dma.done [#allocation3], %s589
        %s591 = sshll.u32 %s564, 4
        %592 = dma.done [#allocation3], %s591
        %s593 = sshll.u32 %s564, 4
        %594 = dma.done [#allocation3], %s593
        %s595 = sshll.u32 %s564, 4
        %596 = dma.done [#allocation3], %s595
        %s597 = sshll.u32 %s564, 4
        %598 = dma.done [#allocation3], %s597
        %s599 = sshll.u32 %s564, 4
        %600 = dma.done [#allocation3], %s599
        %s601 = sshll.u32 %s564, 4
        %602 = dma.done [#allocation3], %s601
        %s603 = sshll.u32 %s564, 4
        %604 = dma.done [#allocation3], %s603
        %s605 = sshll.u32 %s564, 4
        %606 = dma.done [#allocation3], %s605
        %s607 = sshll.u32 %s564, 4
        %608 = dma.done [#allocation3], %s607
        %s609 = sshll.u32 %s564, 4
        %610 = dma.done [#allocation3], %s609
        %s611 = sshll.u32 %s564, 4
        %612 = dma.done [#allocation3], %s611
        %s613 = sshll.u32 %s564, 4
        %614 = dma.done [#allocation3], %s613
        %s615 = sshll.u32 %s564, 4
        %616 = dma.done [#allocation3], %s615
        %s617 = sshll.u32 %s564, 4
        %618 = dma.done [#allocation3], %s617
        %s619 = sshll.u32 %s564, 4
        %620 = dma.done [#allocation3], %s619
        %s621 = sshll.u32 %s564, 4
        %622 = dma.done [#allocation3], %s621
        %s623 = sshll.u32 %s564, 4
        %624 = dma.done [#allocation3], %s623
        %s625 = sshll.u32 %s564, 4
        %626 = dma.done [#allocation3], %s625
        %s627 = sshll.u32 %s564, 4
        %628 = dma.done [#allocation3], %s627
        %v629 = vld [vmem:[#allocation2] sm:$0xff]
        %v630 = vld [vmem:[#allocation2 + $0x8] sm:$0xff]
        %v631 = vld [vmem:[#allocation2 + $0x10] sm:$0xff]
        %v632 = vld [vmem:[#allocation2 + $0x18] sm:$0xff]
        %633 = vst [vmem:[%s51] sm:$0xff] %v629
        %634 = vst [vmem:[%s51 + $0x8] sm:$0xff] %v630
        %635 = vst [vmem:[%s51 + $0x10] sm:$0xff] %v631
        %636 = vst [vmem:[%s51 + $0x18] sm:$0xff] %v632
        %s637 = sand.u32 %s24, 1
        %s638 = scalar_lea.sflag [#allocation7], %s637
        %s639 = sand.u32 %s24, 1
        %s640 = smul.addr %s639, 32
        %s641 = scalar_lea.vmem [#allocation6], %s640
        // Predicated region
        $region141: #{tpu_custom_call.1} parent=11 // pred_check
          %p642 = pneg %p30
        $region142: #{tpu_custom_call.1} parent=11 // pred_check_branch
          %644 = sbr.rel (%p642) target = $region144
        $region143: #{tpu_custom_call.1} parent=11 // pred_region
          %s645 = smul.u32 4, %s15
          %s647 = ssub.s32 512, 512
          %648 = vsyncadd %s638, %s647
          %s649 = smul.addr %s645, 128
          %s650 = scalar_lea.hbm %s2, %s649
          %s651 = sshll.u32 %s641, 4
          %s652 = int_to_ptr.vmem [resolvable:$true] %s651
          %657 = dma.vmem_to_hbm [thread:$0]  %s652, 512, %s650, %s638, 128, 128, 8
        $region144: #{tpu_custom_call.1} parent=11 // pred_fallthru
          _
      $region12: #{tpu_custom_call.1} parent=5 // pred_fallthru
        _
      %p658 = scmp.le.s32.totalorder 1, %s15
      // Predicated region
      $region145: #{tpu_custom_call.1} parent=5 // pred_check
        %p659 = pneg %p658
      $region146: #{tpu_custom_call.1} parent=5 // pred_check_branch
        %661 = sbr.rel (%p659) target = $region148
      $region147: #{tpu_custom_call.1} parent=5 // pred_region
        %s662 = ssub.s32 %s15, 1
        // Predicated region
        $region149: #{tpu_custom_call.1} parent=147 // pred_check
          %p663 = pneg %p36
        $region150: #{tpu_custom_call.1} parent=147 // pred_check_branch
          %665 = sbr.rel (%p663) target = $region152
        $region151: #{tpu_custom_call.1} parent=147 // pred_region
          %s666 = sand.u32 %s27, 1
          %s667 = scalar_lea.sflag [#allocation7], %s666
          %s668 = sand.u32 %s27, 1
          %s669 = smul.addr %s668, 32
          %s670 = scalar_lea.vmem [#allocation6], %s669
          %671 = dma.done %s667, 512
        $region152: #{tpu_custom_call.1} parent=147 // pred_fallthru
          _
      $region148: #{tpu_custom_call.1} parent=5 // pred_fallthru
        _
    $region6: #{tpu_custom_call.1} parent=1 // loop_footer
      %s19 = sadd.s32 1, %s15
    $region7: #{tpu_custom_call.1} parent=1 // loop_footer_branch
      %14 = sbr.rel target = $region3
    $region8: #{tpu_custom_call.1} parent=1 // loop_exit
      _
    %672 = vsyncpa [#allocation7], 1
    %s673 = scalar_lea.sflag [#allocation7], 1
    %674 = vsyncpa %s673, 1
  %675 = vsyncmov [#allocation3]
  %s676 = vpop.sfrf %675
  %p677 = scmp.eq.s32.totalorder %s676, 0
  %p678 = pneg %p677
  %680 = shalt.err (%p678)

</llo_original>
